<compile_context>
chip_gen: v6e
topology: v6e:2x2x1
jax: 0.10.0
libtpu: 0.0.40
codegen_flags: <defaults>
</compile_context>

<pallas_src>
import functools
import math

import jax
import jax.numpy as jnp
from jax.experimental import pallas as pl
from jax.experimental.pallas import tpu as pltpu

EPS = 1e-5


def _instance_norm_f32(z):
    # per-row normalization over the last (embedding) dim, biased variance
    mu = jnp.mean(z, axis=-1, keepdims=True)
    var = jnp.mean((z - mu) ** 2, axis=-1, keepdims=True)
    return (z - mu) * jax.lax.rsqrt(var + EPS)


def block_kernel(x_ref, wqkv_ref, wproj_ref, w1_ref, b1_ref, w2_ref, b2_ref,
                 o_ref, *, n_heads):
    xb = x_ref[...].astype(jnp.float32)          # (Bb, T, C)
    Bb, T, C = xb.shape
    hs = C // n_heads
    scale = 1.0 / math.sqrt(C)                   # reference divides by sqrt(n_emb)

    x2 = xb.reshape(Bb * T, C)                   # merge major dims only (cheap)

    # --- sub-block 1: x = x + proj(multi_head_attention(instance_norm(x))) ---
    xn = _instance_norm_f32(x2)
    xn_b = xn.astype(jnp.bfloat16)

    # Fused QKV projection: single full-width MXU matmul, bf16 in / f32 acc.
    qkv = jnp.dot(xn_b, wqkv_ref[...], preferred_element_type=jnp.float32)

    row = jax.lax.broadcasted_iota(jnp.int32, (T, T), 0)
    col = jax.lax.broadcasted_iota(jnp.int32, (T, T), 1)
    causal = row >= col                          # lower-triangular mask

    # NOTE: for large T, tile the query dim with an online-softmax (flash)
    # accumulator instead of materializing (T, T) scores; unnecessary at these
    # sizes and it would only reduce VMEM pressure, not change semantics.
    head_outs = []
    for h in range(n_heads):                     # n_heads static & small -> unrolled
        q = qkv[:, h * hs:(h + 1) * hs].reshape(Bb, T, hs)
        k = qkv[:, C + h * hs:C + (h + 1) * hs].reshape(Bb, T, hs)
        v = qkv[:, 2 * C + h * hs:2 * C + (h + 1) * hs].reshape(Bb, T, hs)

        s = jnp.einsum('bqd,bkd->bqk', q.astype(jnp.bfloat16),
                       k.astype(jnp.bfloat16),
                       preferred_element_type=jnp.float32) * scale
        s = jnp.where(causal, s, -jnp.inf)
        s = s - jnp.max(s, axis=-1, keepdims=True)
        e = jnp.exp(s)
        inv = pl.reciprocal(jnp.sum(e, axis=-1, keepdims=True), approx=True)
        p = e * inv

        head_outs.append(jnp.einsum('bqk,bkd->bqd', p.astype(jnp.bfloat16),
                                    v.astype(jnp.bfloat16),
                                    preferred_element_type=jnp.float32))

    # Lay heads side-by-side along the lane dim -> single (M, C) @ (C, C) proj.
    head_cat = jnp.concatenate(head_outs, axis=-1).reshape(Bb * T, C)
    sa = jnp.dot(head_cat.astype(jnp.bfloat16), wproj_ref[...],
                 preferred_element_type=jnp.float32)

    x1 = x2 + sa                                 # residual in f32

    # --- sub-block 2: x = x + ffwd(instance_norm(x)) ---
    xn2 = _instance_norm_f32(x1).astype(jnp.bfloat16)
    h1 = jnp.dot(xn2, w1_ref[...], preferred_element_type=jnp.float32) + b1_ref[...]
    h1 = jnp.maximum(h1, 0.0).astype(jnp.bfloat16)
    ff = jnp.dot(h1, w2_ref[...], preferred_element_type=jnp.float32) + b2_ref[...]

    o_ref[...] = (x1 + ff).reshape(Bb, T, C).astype(o_ref.dtype)


def _pick_batch_block(B, cap=8):
    bb = min(B, cap)
    while B % bb:
        bb -= 1
    return bb


def block_forward(x, params, *, batch_block=None):
    B, T, C = x.shape
    nh, _, hs = params["wq"].shape

    # --- wrapper-side weight fusion + bf16 cast (one-time prep) ---
    def heads_to_cols(w):                        # (nh, C, hs) -> (C, nh*hs)
        return jnp.transpose(w, (1, 0, 2)).reshape(C, nh * hs)

    wqkv = jnp.concatenate([heads_to_cols(params["wq"]),
                            heads_to_cols(params["wk"]),
                            heads_to_cols(params["wv"])],
                           axis=1).astype(jnp.bfloat16)        # (C, 3C)
    wproj = params["wproj"].reshape(nh * hs, C).astype(jnp.bfloat16)  # (C, C)
    w1 = params["w1"].astype(jnp.bfloat16)                     # (C, 4C)
    w2 = params["w2"].astype(jnp.bfloat16)                     # (4C, C)
    b1 = params["b1"].astype(jnp.float32)                      # (1, 4C)
    b2 = params["b2"].astype(jnp.float32)                      # (1, C)

    Bb = batch_block or _pick_batch_block(B)
    grid = (B // Bb,)

    def const(shape):
        # weights: same block every grid step.  (At real model sizes, add
        # pipeline_mode=pl.Buffered(1) here to avoid double-buffering them.)
        return pl.BlockSpec(shape, lambda i, _n=len(shape): (0,) * _n)

    kernel = functools.partial(block_kernel, n_heads=nh)

    return pl.pallas_call(
        kernel,
        out_shape=jax.ShapeDtypeStruct((B, T, C), x.dtype),
        grid=grid,
        in_specs=[
            pl.BlockSpec((Bb, T, C), lambda i: (i, 0, 0)),     # x
            const((C, 3 * C)),                                 # fused Wqkv (bf16)
            const((C, C)),                                     # Wproj (bf16)
            const((C, 4 * C)),                                 # W1^T (bf16)
            const((1, 4 * C)),                                 # b1 (f32)
            const((4 * C, C)),                                 # W2^T (bf16)
            const((1, C)),                                     # b2 (f32)
        ],
        out_specs=pl.BlockSpec((Bb, T, C), lambda i: (i, 0, 0)),
        compiler_params=pltpu.CompilerParams(
            dimension_semantics=("parallel",),                 # batch axis -> 2 TCs on v7x
            vmem_limit_bytes=32 * 1024 * 1024),
    )(x, wqkv, wproj, w1, b1, w2, b2)


def init_params(key, n_emb, n_heads):
    """Deterministic synthetic init (PyTorch-style uniform(-1/sqrt(fan_in), ...))."""
    hs = n_emb // n_heads
    ks = jax.random.split(key, 8)

    def unif(k, shape, fan_in):
        bound = 1.0 / math.sqrt(fan_in)
        return jax.random.uniform(k, shape, jnp.float32, -bound, bound)

    return {
        "wq":    unif(ks[0], (n_heads, n_emb, hs), n_emb),
        "wk":    unif(ks[1], (n_heads, n_emb, hs), n_emb),
        "wv":    unif(ks[2], (n_heads, n_emb, hs), n_emb),
        "wproj": unif(ks[3], (n_heads, hs, n_emb), n_emb),
        "w1":    unif(ks[4], (n_emb, 4 * n_emb), n_emb),
        "b1":    unif(ks[5], (1, 4 * n_emb), n_emb),
        "w2":    unif(ks[6], (4 * n_emb, n_emb), 4 * n_emb),
        "b2":    unif(ks[7], (1, n_emb), 4 * n_emb),
    }


def reference_block(x, p):
    """Pure-JAX f32 reference replicating the PyTorch forward (eval mode)."""
    def inorm(z):
        mu = z.mean(-1, keepdims=True)
        var = ((z - mu) ** 2).mean(-1, keepdims=True)
        return (z - mu) / jnp.sqrt(var + EPS)

    B, T, C = x.shape
    nh = p["wq"].shape[0]
    mask = jnp.tril(jnp.ones((T, T), bool))

    xn = inorm(x)
    sa = jnp.zeros_like(x)
    for h in range(nh):
        q = xn @ p["wq"][h]
        k = xn @ p["wk"][h]
        v = xn @ p["wv"][h]
        wei = (q @ jnp.swapaxes(k, -1, -2)) / math.sqrt(C)
        wei = jnp.where(mask, wei, -jnp.inf)
        wei = jax.nn.softmax(wei, axis=-1)
        sa = sa + (wei @ v) @ p["wproj"][h]
    x1 = x + sa

    xn2 = inorm(x1)
    ff = jnp.maximum(xn2 @ p["w1"] + p["b1"], 0.0) @ p["w2"] + p["b2"]
    return x1 + ff


if __name__ == "__main__":
    B, T, N_EMB, N_HEADS = 2, 8, 32, 4   # BLOCK_SIZE >= T assumed (causal mask)

    key = jax.random.PRNGKey(0)
    kx, kp = jax.random.split(key)
    x = jax.random.normal(kx, (B, T, N_EMB), jnp.float32)
    params = init_params(kp, N_EMB, N_HEADS)

    out = jax.block_until_ready(block_forward(x, params))
    ref = jax.block_until_ready(reference_block(x, params))

    assert out.shape == (B, T, N_EMB)
    # bf16 matmul operands (f32 accumulation) + approx reciprocal -> looser tol
    assert jnp.allclose(out, ref, atol=5e-2, rtol=5e-2), \
        f"max abs err = {jnp.max(jnp.abs(out - ref))}"

    print("KERNEL_OK")
</pallas_src>

<mosaic_0001>
module attributes {stable_mosaic.version = 11 : i64} {
  func.func @block_kernel(%arg0: i32, %arg1: memref<2x8x32xf32, #tpu.memory_space<vmem>>, %arg2: memref<32x96xbf16, #tpu.memory_space<vmem>>, %arg3: memref<32x32xbf16, #tpu.memory_space<vmem>>, %arg4: memref<32x128xbf16, #tpu.memory_space<vmem>>, %arg5: memref<1x128xf32, #tpu.memory_space<vmem>>, %arg6: memref<128x32xbf16, #tpu.memory_space<vmem>>, %arg7: memref<1x32xf32, #tpu.memory_space<vmem>>, %arg8: memref<2x8x32xf32, #tpu.memory_space<vmem>>) attributes {dimension_semantics = [#tpu.dimension_semantics<parallel>], iteration_bounds = array<i64: 1>, scalar_prefetch = 0 : i64, scratch_operands = 0 : i64, tpu.core_type = #tpu.core_type<tc>, window_params = [{transform_indices = @transform_0, window_bounds = array<i64: 2, 8, 32>}, {pipeline_mode = #tpu.pipeline_mode<synchronous>, transform_indices = @transform_1, window_bounds = array<i64: 32, 96>}, {pipeline_mode = #tpu.pipeline_mode<synchronous>, transform_indices = @transform_2, window_bounds = array<i64: 32, 32>}, {pipeline_mode = #tpu.pipeline_mode<synchronous>, transform_indices = @transform_3, window_bounds = array<i64: 32, 128>}, {pipeline_mode = #tpu.pipeline_mode<synchronous>, transform_indices = @transform_4, window_bounds = array<i64: 1, 128>}, {pipeline_mode = #tpu.pipeline_mode<synchronous>, transform_indices = @transform_5, window_bounds = array<i64: 128, 32>}, {pipeline_mode = #tpu.pipeline_mode<synchronous>, transform_indices = @transform_6, window_bounds = array<i64: 1, 32>}, {transform_indices = @transform_7, window_bounds = array<i64: 2, 8, 32>}]} {
    %c0 = arith.constant 0 : index
    %c0_0 = arith.constant 0 : index
    %c0_1 = arith.constant 0 : index
    %0 = vector.load %arg1[%c0, %c0_0, %c0_1] : memref<2x8x32xf32, #tpu.memory_space<vmem>>, vector<2x8x32xf32>
    %1 = vector.shape_cast %0 : vector<2x8x32xf32> to vector<16x32xf32>
    %cst = arith.constant dense<0.000000e+00> : vector<16xf32>
    %2 = vector.multi_reduction <add>, %1, %cst [1] : vector<16x32xf32> to vector<16xf32>
    %3 = vector.shape_cast %2 : vector<16xf32> to vector<16x1xf32>
    %cst_2 = arith.constant 3.200000e+01 : f32
    %4 = vector.broadcast %cst_2 : f32 to vector<16x1xf32>
    %5 = arith.divf %3, %4 : vector<16x1xf32>
    %6 = vector.broadcast %5 : vector<16x1xf32> to vector<16x32xf32>
    %7 = arith.subf %1, %6 : vector<16x32xf32>
    %8 = arith.mulf %7, %7 : vector<16x32xf32>
    %cst_3 = arith.constant dense<0.000000e+00> : vector<16xf32>
    %9 = vector.multi_reduction <add>, %8, %cst_3 [1] : vector<16x32xf32> to vector<16xf32>
    %10 = vector.shape_cast %9 : vector<16xf32> to vector<16x1xf32>
    %cst_4 = arith.constant 3.200000e+01 : f32
    %11 = vector.broadcast %cst_4 : f32 to vector<16x1xf32>
    %12 = arith.divf %10, %11 : vector<16x1xf32>
    %13 = vector.broadcast %5 : vector<16x1xf32> to vector<16x32xf32>
    %14 = arith.subf %1, %13 : vector<16x32xf32>
    %cst_5 = arith.constant 9.99999974E-6 : f32
    %15 = vector.broadcast %cst_5 : f32 to vector<16x1xf32>
    %16 = arith.addf %12, %15 : vector<16x1xf32>
    %17 = math.rsqrt %16 : vector<16x1xf32>
    %18 = vector.broadcast %17 : vector<16x1xf32> to vector<16x32xf32>
    %19 = arith.mulf %14, %18 : vector<16x32xf32>
    %20 = arith.truncf %19 : vector<16x32xf32> to vector<16x32xbf16>
    %c0_6 = arith.constant 0 : index
    %c0_7 = arith.constant 0 : index
    %21 = vector.load %arg2[%c0_6, %c0_7] : memref<32x96xbf16, #tpu.memory_space<vmem>>, vector<32x96xbf16>
    %cst_8 = arith.constant dense<0.000000e+00> : vector<16x96xf32>
    %22 = tpu.matmul %20, %21, %cst_8 {dimension_numbers = #tpu.dot_dimension_numbers<[1], [0], [0], [1], [0, 0, 1, 1], [], []>} : vector<16x32xbf16>, vector<32x96xbf16>, vector<16x96xf32> -> vector<16x96xf32>
    %23 = tpu.iota {dimensions = array<i32: 0>} : vector<8x8xi32>
    %24 = tpu.iota {dimensions = array<i32: 1>} : vector<8x8xi32>
    %25 = arith.cmpi sge, %23, %24 : vector<8x8xi32>
    %26 = vector.extract_strided_slice %22 {offsets = [0, 0], sizes = [16, 8], strides = [1, 1]} : vector<16x96xf32> to vector<16x8xf32>
    %27 = vector.shape_cast %26 : vector<16x8xf32> to vector<2x8x8xf32>
    %28 = vector.extract_strided_slice %22 {offsets = [0, 32], sizes = [16, 8], strides = [1, 1]} : vector<16x96xf32> to vector<16x8xf32>
    %29 = vector.shape_cast %28 : vector<16x8xf32> to vector<2x8x8xf32>
    %30 = vector.extract_strided_slice %22 {offsets = [0, 64], sizes = [16, 8], strides = [1, 1]} : vector<16x96xf32> to vector<16x8xf32>
    %31 = vector.shape_cast %30 : vector<16x8xf32> to vector<2x8x8xf32>
    %32 = arith.truncf %27 : vector<2x8x8xf32> to vector<2x8x8xbf16>
    %33 = arith.truncf %29 : vector<2x8x8xf32> to vector<2x8x8xbf16>
    "tpu.trace_start"() <{level = 10 : i32, message = "bqd,bkd->bqk"}> : () -> ()
    %cst_9 = arith.constant dense<0.000000e+00> : vector<2x8x8xf32>
    %34 = tpu.matmul %32, %33, %cst_9 {dimension_numbers = #tpu.dot_dimension_numbers<[2], [2], [1], [1], [0, 0, 0, 1, 1, 1], [0], [0]>} : vector<2x8x8xbf16>, vector<2x8x8xbf16>, vector<2x8x8xf32> -> vector<2x8x8xf32>
    "tpu.trace_stop"() : () -> ()
    %cst_10 = arith.constant 0.176776692 : f32
    %35 = vector.broadcast %cst_10 : f32 to vector<2x8x8xf32>
    %36 = arith.mulf %34, %35 : vector<2x8x8xf32>
    %cst_11 = arith.constant 0xFF800000 : f32
    %37 = vector.shape_cast %25 : vector<8x8xi1> to vector<1x8x8xi1>
    %38 = vector.broadcast %37 : vector<1x8x8xi1> to vector<2x8x8xi1>
    %39 = vector.broadcast %cst_11 : f32 to vector<2x8x8xf32>
    %40 = arith.select %38, %36, %39 : vector<2x8x8xi1>, vector<2x8x8xf32>
    %cst_12 = arith.constant dense<0xFF800000> : vector<2x8xf32>
    %41 = vector.multi_reduction <maximumf>, %40, %cst_12 [2] : vector<2x8x8xf32> to vector<2x8xf32>
    %42 = vector.shape_cast %41 : vector<2x8xf32> to vector<2x8x1xf32>
    %43 = vector.broadcast %42 : vector<2x8x1xf32> to vector<2x8x8xf32>
    %44 = arith.subf %40, %43 : vector<2x8x8xf32>
    %45 = math.exp %44 : vector<2x8x8xf32>
    %cst_13 = arith.constant dense<0.000000e+00> : vector<2x8xf32>
    %46 = vector.multi_reduction <add>, %45, %cst_13 [2] : vector<2x8x8xf32> to vector<2x8xf32>
    %47 = vector.shape_cast %46 : vector<2x8xf32> to vector<2x8x1xf32>
    %48 = tpu.reciprocal %47 {approx = true} : vector<2x8x1xf32> -> vector<2x8x1xf32>
    %49 = vector.broadcast %48 : vector<2x8x1xf32> to vector<2x8x8xf32>
    %50 = arith.mulf %45, %49 : vector<2x8x8xf32>
    %51 = arith.truncf %50 : vector<2x8x8xf32> to vector<2x8x8xbf16>
    %52 = arith.truncf %31 : vector<2x8x8xf32> to vector<2x8x8xbf16>
    "tpu.trace_start"() <{level = 10 : i32, message = "bqk,bkd->bqd"}> : () -> ()
    %cst_14 = arith.constant dense<0.000000e+00> : vector<2x8x8xf32>
    %53 = tpu.matmul %51, %52, %cst_14 {dimension_numbers = #tpu.dot_dimension_numbers<[2], [1], [1], [2], [0, 0, 0, 1, 1, 2], [0], [0]>} : vector<2x8x8xbf16>, vector<2x8x8xbf16>, vector<2x8x8xf32> -> vector<2x8x8xf32>
    "tpu.trace_stop"() : () -> ()
    %54 = vector.extract_strided_slice %22 {offsets = [0, 8], sizes = [16, 8], strides = [1, 1]} : vector<16x96xf32> to vector<16x8xf32>
    %55 = vector.shape_cast %54 : vector<16x8xf32> to vector<2x8x8xf32>
    %56 = vector.extract_strided_slice %22 {offsets = [0, 40], sizes = [16, 8], strides = [1, 1]} : vector<16x96xf32> to vector<16x8xf32>
    %57 = vector.shape_cast %56 : vector<16x8xf32> to vector<2x8x8xf32>
    %58 = vector.extract_strided_slice %22 {offsets = [0, 72], sizes = [16, 8], strides = [1, 1]} : vector<16x96xf32> to vector<16x8xf32>
    %59 = vector.shape_cast %58 : vector<16x8xf32> to vector<2x8x8xf32>
    %60 = arith.truncf %55 : vector<2x8x8xf32> to vector<2x8x8xbf16>
    %61 = arith.truncf %57 : vector<2x8x8xf32> to vector<2x8x8xbf16>
    "tpu.trace_start"() <{level = 10 : i32, message = "bqd,bkd->bqk"}> : () -> ()
    %cst_15 = arith.constant dense<0.000000e+00> : vector<2x8x8xf32>
    %62 = tpu.matmul %60, %61, %cst_15 {dimension_numbers = #tpu.dot_dimension_numbers<[2], [2], [1], [1], [0, 0, 0, 1, 1, 1], [0], [0]>} : vector<2x8x8xbf16>, vector<2x8x8xbf16>, vector<2x8x8xf32> -> vector<2x8x8xf32>
    "tpu.trace_stop"() : () -> ()
    %cst_16 = arith.constant 0.176776692 : f32
    %63 = vector.broadcast %cst_16 : f32 to vector<2x8x8xf32>
    %64 = arith.mulf %62, %63 : vector<2x8x8xf32>
    %cst_17 = arith.constant 0xFF800000 : f32
    %65 = vector.shape_cast %25 : vector<8x8xi1> to vector<1x8x8xi1>
    %66 = vector.broadcast %65 : vector<1x8x8xi1> to vector<2x8x8xi1>
    %67 = vector.broadcast %cst_17 : f32 to vector<2x8x8xf32>
    %68 = arith.select %66, %64, %67 : vector<2x8x8xi1>, vector<2x8x8xf32>
    %cst_18 = arith.constant dense<0xFF800000> : vector<2x8xf32>
    %69 = vector.multi_reduction <maximumf>, %68, %cst_18 [2] : vector<2x8x8xf32> to vector<2x8xf32>
    %70 = vector.shape_cast %69 : vector<2x8xf32> to vector<2x8x1xf32>
    %71 = vector.broadcast %70 : vector<2x8x1xf32> to vector<2x8x8xf32>
    %72 = arith.subf %68, %71 : vector<2x8x8xf32>
    %73 = math.exp %72 : vector<2x8x8xf32>
    %cst_19 = arith.constant dense<0.000000e+00> : vector<2x8xf32>
    %74 = vector.multi_reduction <add>, %73, %cst_19 [2] : vector<2x8x8xf32> to vector<2x8xf32>
    %75 = vector.shape_cast %74 : vector<2x8xf32> to vector<2x8x1xf32>
    %76 = tpu.reciprocal %75 {approx = true} : vector<2x8x1xf32> -> vector<2x8x1xf32>
    %77 = vector.broadcast %76 : vector<2x8x1xf32> to vector<2x8x8xf32>
    %78 = arith.mulf %73, %77 : vector<2x8x8xf32>
    %79 = arith.truncf %78 : vector<2x8x8xf32> to vector<2x8x8xbf16>
    %80 = arith.truncf %59 : vector<2x8x8xf32> to vector<2x8x8xbf16>
    "tpu.trace_start"() <{level = 10 : i32, message = "bqk,bkd->bqd"}> : () -> ()
    %cst_20 = arith.constant dense<0.000000e+00> : vector<2x8x8xf32>
    %81 = tpu.matmul %79, %80, %cst_20 {dimension_numbers = #tpu.dot_dimension_numbers<[2], [1], [1], [2], [0, 0, 0, 1, 1, 2], [0], [0]>} : vector<2x8x8xbf16>, vector<2x8x8xbf16>, vector<2x8x8xf32> -> vector<2x8x8xf32>
    "tpu.trace_stop"() : () -> ()
    %82 = vector.extract_strided_slice %22 {offsets = [0, 16], sizes = [16, 8], strides = [1, 1]} : vector<16x96xf32> to vector<16x8xf32>
    %83 = vector.shape_cast %82 : vector<16x8xf32> to vector<2x8x8xf32>
    %84 = vector.extract_strided_slice %22 {offsets = [0, 48], sizes = [16, 8], strides = [1, 1]} : vector<16x96xf32> to vector<16x8xf32>
    %85 = vector.shape_cast %84 : vector<16x8xf32> to vector<2x8x8xf32>
    %86 = vector.extract_strided_slice %22 {offsets = [0, 80], sizes = [16, 8], strides = [1, 1]} : vector<16x96xf32> to vector<16x8xf32>
    %87 = vector.shape_cast %86 : vector<16x8xf32> to vector<2x8x8xf32>
    %88 = arith.truncf %83 : vector<2x8x8xf32> to vector<2x8x8xbf16>
    %89 = arith.truncf %85 : vector<2x8x8xf32> to vector<2x8x8xbf16>
    "tpu.trace_start"() <{level = 10 : i32, message = "bqd,bkd->bqk"}> : () -> ()
    %cst_21 = arith.constant dense<0.000000e+00> : vector<2x8x8xf32>
    %90 = tpu.matmul %88, %89, %cst_21 {dimension_numbers = #tpu.dot_dimension_numbers<[2], [2], [1], [1], [0, 0, 0, 1, 1, 1], [0], [0]>} : vector<2x8x8xbf16>, vector<2x8x8xbf16>, vector<2x8x8xf32> -> vector<2x8x8xf32>
    "tpu.trace_stop"() : () -> ()
    %cst_22 = arith.constant 0.176776692 : f32
    %91 = vector.broadcast %cst_22 : f32 to vector<2x8x8xf32>
    %92 = arith.mulf %90, %91 : vector<2x8x8xf32>
    %cst_23 = arith.constant 0xFF800000 : f32
    %93 = vector.shape_cast %25 : vector<8x8xi1> to vector<1x8x8xi1>
    %94 = vector.broadcast %93 : vector<1x8x8xi1> to vector<2x8x8xi1>
    %95 = vector.broadcast %cst_23 : f32 to vector<2x8x8xf32>
    %96 = arith.select %94, %92, %95 : vector<2x8x8xi1>, vector<2x8x8xf32>
    %cst_24 = arith.constant dense<0xFF800000> : vector<2x8xf32>
    %97 = vector.multi_reduction <maximumf>, %96, %cst_24 [2] : vector<2x8x8xf32> to vector<2x8xf32>
    %98 = vector.shape_cast %97 : vector<2x8xf32> to vector<2x8x1xf32>
    %99 = vector.broadcast %98 : vector<2x8x1xf32> to vector<2x8x8xf32>
    %100 = arith.subf %96, %99 : vector<2x8x8xf32>
    %101 = math.exp %100 : vector<2x8x8xf32>
    %cst_25 = arith.constant dense<0.000000e+00> : vector<2x8xf32>
    %102 = vector.multi_reduction <add>, %101, %cst_25 [2] : vector<2x8x8xf32> to vector<2x8xf32>
    %103 = vector.shape_cast %102 : vector<2x8xf32> to vector<2x8x1xf32>
    %104 = tpu.reciprocal %103 {approx = true} : vector<2x8x1xf32> -> vector<2x8x1xf32>
    %105 = vector.broadcast %104 : vector<2x8x1xf32> to vector<2x8x8xf32>
    %106 = arith.mulf %101, %105 : vector<2x8x8xf32>
    %107 = arith.truncf %106 : vector<2x8x8xf32> to vector<2x8x8xbf16>
    %108 = arith.truncf %87 : vector<2x8x8xf32> to vector<2x8x8xbf16>
    "tpu.trace_start"() <{level = 10 : i32, message = "bqk,bkd->bqd"}> : () -> ()
    %cst_26 = arith.constant dense<0.000000e+00> : vector<2x8x8xf32>
    %109 = tpu.matmul %107, %108, %cst_26 {dimension_numbers = #tpu.dot_dimension_numbers<[2], [1], [1], [2], [0, 0, 0, 1, 1, 2], [0], [0]>} : vector<2x8x8xbf16>, vector<2x8x8xbf16>, vector<2x8x8xf32> -> vector<2x8x8xf32>
    "tpu.trace_stop"() : () -> ()
    %110 = vector.extract_strided_slice %22 {offsets = [0, 24], sizes = [16, 8], strides = [1, 1]} : vector<16x96xf32> to vector<16x8xf32>
    %111 = vector.shape_cast %110 : vector<16x8xf32> to vector<2x8x8xf32>
    %112 = vector.extract_strided_slice %22 {offsets = [0, 56], sizes = [16, 8], strides = [1, 1]} : vector<16x96xf32> to vector<16x8xf32>
    %113 = vector.shape_cast %112 : vector<16x8xf32> to vector<2x8x8xf32>
    %114 = vector.extract_strided_slice %22 {offsets = [0, 88], sizes = [16, 8], strides = [1, 1]} : vector<16x96xf32> to vector<16x8xf32>
    %115 = vector.shape_cast %114 : vector<16x8xf32> to vector<2x8x8xf32>
    %116 = arith.truncf %111 : vector<2x8x8xf32> to vector<2x8x8xbf16>
    %117 = arith.truncf %113 : vector<2x8x8xf32> to vector<2x8x8xbf16>
    "tpu.trace_start"() <{level = 10 : i32, message = "bqd,bkd->bqk"}> : () -> ()
    %cst_27 = arith.constant dense<0.000000e+00> : vector<2x8x8xf32>
    %118 = tpu.matmul %116, %117, %cst_27 {dimension_numbers = #tpu.dot_dimension_numbers<[2], [2], [1], [1], [0, 0, 0, 1, 1, 1], [0], [0]>} : vector<2x8x8xbf16>, vector<2x8x8xbf16>, vector<2x8x8xf32> -> vector<2x8x8xf32>
    "tpu.trace_stop"() : () -> ()
    %cst_28 = arith.constant 0.176776692 : f32
    %119 = vector.broadcast %cst_28 : f32 to vector<2x8x8xf32>
    %120 = arith.mulf %118, %119 : vector<2x8x8xf32>
    %cst_29 = arith.constant 0xFF800000 : f32
    %121 = vector.shape_cast %25 : vector<8x8xi1> to vector<1x8x8xi1>
    %122 = vector.broadcast %121 : vector<1x8x8xi1> to vector<2x8x8xi1>
    %123 = vector.broadcast %cst_29 : f32 to vector<2x8x8xf32>
    %124 = arith.select %122, %120, %123 : vector<2x8x8xi1>, vector<2x8x8xf32>
    %cst_30 = arith.constant dense<0xFF800000> : vector<2x8xf32>
    %125 = vector.multi_reduction <maximumf>, %124, %cst_30 [2] : vector<2x8x8xf32> to vector<2x8xf32>
    %126 = vector.shape_cast %125 : vector<2x8xf32> to vector<2x8x1xf32>
    %127 = vector.broadcast %126 : vector<2x8x1xf32> to vector<2x8x8xf32>
    %128 = arith.subf %124, %127 : vector<2x8x8xf32>
    %129 = math.exp %128 : vector<2x8x8xf32>
    %cst_31 = arith.constant dense<0.000000e+00> : vector<2x8xf32>
    %130 = vector.multi_reduction <add>, %129, %cst_31 [2] : vector<2x8x8xf32> to vector<2x8xf32>
    %131 = vector.shape_cast %130 : vector<2x8xf32> to vector<2x8x1xf32>
    %132 = tpu.reciprocal %131 {approx = true} : vector<2x8x1xf32> -> vector<2x8x1xf32>
    %133 = vector.broadcast %132 : vector<2x8x1xf32> to vector<2x8x8xf32>
    %134 = arith.mulf %129, %133 : vector<2x8x8xf32>
    %135 = arith.truncf %134 : vector<2x8x8xf32> to vector<2x8x8xbf16>
    %136 = arith.truncf %115 : vector<2x8x8xf32> to vector<2x8x8xbf16>
    "tpu.trace_start"() <{level = 10 : i32, message = "bqk,bkd->bqd"}> : () -> ()
    %cst_32 = arith.constant dense<0.000000e+00> : vector<2x8x8xf32>
    %137 = tpu.matmul %135, %136, %cst_32 {dimension_numbers = #tpu.dot_dimension_numbers<[2], [1], [1], [2], [0, 0, 0, 1, 1, 2], [0], [0]>} : vector<2x8x8xbf16>, vector<2x8x8xbf16>, vector<2x8x8xf32> -> vector<2x8x8xf32>
    "tpu.trace_stop"() : () -> ()
    %138 = tpu.concatenate %53, %81, %109, %137 in 2 : vector<2x8x8xf32>, vector<2x8x8xf32>, vector<2x8x8xf32>, vector<2x8x8xf32> -> vector<2x8x32xf32>
    %139 = vector.shape_cast %138 : vector<2x8x32xf32> to vector<16x32xf32>
    %140 = arith.truncf %139 : vector<16x32xf32> to vector<16x32xbf16>
    %c0_33 = arith.constant 0 : index
    %c0_34 = arith.constant 0 : index
    %141 = vector.load %arg3[%c0_33, %c0_34] : memref<32x32xbf16, #tpu.memory_space<vmem>>, vector<32x32xbf16>
    %cst_35 = arith.constant dense<0.000000e+00> : vector<16x32xf32>
    %142 = tpu.matmul %140, %141, %cst_35 {dimension_numbers = #tpu.dot_dimension_numbers<[1], [0], [0], [1], [0, 0, 1, 1], [], []>} : vector<16x32xbf16>, vector<32x32xbf16>, vector<16x32xf32> -> vector<16x32xf32>
    %143 = arith.addf %1, %142 : vector<16x32xf32>
    %cst_36 = arith.constant dense<0.000000e+00> : vector<16xf32>
    %144 = vector.multi_reduction <add>, %143, %cst_36 [1] : vector<16x32xf32> to vector<16xf32>
    %145 = vector.shape_cast %144 : vector<16xf32> to vector<16x1xf32>
    %cst_37 = arith.constant 3.200000e+01 : f32
    %146 = vector.broadcast %cst_37 : f32 to vector<16x1xf32>
    %147 = arith.divf %145, %146 : vector<16x1xf32>
    %148 = vector.broadcast %147 : vector<16x1xf32> to vector<16x32xf32>
    %149 = arith.subf %143, %148 : vector<16x32xf32>
    %150 = arith.mulf %149, %149 : vector<16x32xf32>
    %cst_38 = arith.constant dense<0.000000e+00> : vector<16xf32>
    %151 = vector.multi_reduction <add>, %150, %cst_38 [1] : vector<16x32xf32> to vector<16xf32>
    %152 = vector.shape_cast %151 : vector<16xf32> to vector<16x1xf32>
    %cst_39 = arith.constant 3.200000e+01 : f32
    %153 = vector.broadcast %cst_39 : f32 to vector<16x1xf32>
    %154 = arith.divf %152, %153 : vector<16x1xf32>
    %155 = vector.broadcast %147 : vector<16x1xf32> to vector<16x32xf32>
    %156 = arith.subf %143, %155 : vector<16x32xf32>
    %cst_40 = arith.constant 9.99999974E-6 : f32
    %157 = vector.broadcast %cst_40 : f32 to vector<16x1xf32>
    %158 = arith.addf %154, %157 : vector<16x1xf32>
    %159 = math.rsqrt %158 : vector<16x1xf32>
    %160 = vector.broadcast %159 : vector<16x1xf32> to vector<16x32xf32>
    %161 = arith.mulf %156, %160 : vector<16x32xf32>
    %162 = arith.truncf %161 : vector<16x32xf32> to vector<16x32xbf16>
    %c0_41 = arith.constant 0 : index
    %c0_42 = arith.constant 0 : index
    %163 = vector.load %arg4[%c0_41, %c0_42] : memref<32x128xbf16, #tpu.memory_space<vmem>>, vector<32x128xbf16>
    %cst_43 = arith.constant dense<0.000000e+00> : vector<16x128xf32>
    %164 = tpu.matmul %162, %163, %cst_43 {dimension_numbers = #tpu.dot_dimension_numbers<[1], [0], [0], [1], [0, 0, 1, 1], [], []>} : vector<16x32xbf16>, vector<32x128xbf16>, vector<16x128xf32> -> vector<16x128xf32>
    %c0_44 = arith.constant 0 : index
    %c0_45 = arith.constant 0 : index
    %165 = vector.load %arg5[%c0_44, %c0_45] : memref<1x128xf32, #tpu.memory_space<vmem>>, vector<1x128xf32>
    %166 = vector.broadcast %165 : vector<1x128xf32> to vector<16x128xf32>
    %167 = arith.addf %164, %166 : vector<16x128xf32>
    %cst_46 = arith.constant 0.000000e+00 : f32
    %168 = vector.broadcast %cst_46 : f32 to vector<16x128xf32>
    %169 = arith.maximumf %167, %168 : vector<16x128xf32>
    %170 = arith.truncf %169 : vector<16x128xf32> to vector<16x128xbf16>
    %c0_47 = arith.constant 0 : index
    %c0_48 = arith.constant 0 : index
    %171 = vector.load %arg6[%c0_47, %c0_48] : memref<128x32xbf16, #tpu.memory_space<vmem>>, vector<128x32xbf16>
    %cst_49 = arith.constant dense<0.000000e+00> : vector<16x32xf32>
    %172 = tpu.matmul %170, %171, %cst_49 {dimension_numbers = #tpu.dot_dimension_numbers<[1], [0], [0], [1], [0, 0, 1, 1], [], []>} : vector<16x128xbf16>, vector<128x32xbf16>, vector<16x32xf32> -> vector<16x32xf32>
    %c0_50 = arith.constant 0 : index
    %c0_51 = arith.constant 0 : index
    %173 = vector.load %arg7[%c0_50, %c0_51] : memref<1x32xf32, #tpu.memory_space<vmem>>, vector<1x32xf32>
    %174 = vector.broadcast %173 : vector<1x32xf32> to vector<16x32xf32>
    %175 = arith.addf %172, %174 : vector<16x32xf32>
    %176 = arith.addf %143, %175 : vector<16x32xf32>
    %177 = vector.shape_cast %176 : vector<16x32xf32> to vector<2x8x32xf32>
    %c0_52 = arith.constant 0 : index
    %c0_53 = arith.constant 0 : index
    %c0_54 = arith.constant 0 : index
    %178 = vector.load %arg8[%c0_52, %c0_53, %c0_54] : memref<2x8x32xf32, #tpu.memory_space<vmem>>, vector<2x8x32xf32>
    tpu.vector_store %arg8[%c0_52, %c0_53, %c0_54], %177 {strides = array<i32>} : memref<2x8x32xf32, #tpu.memory_space<vmem>>, vector<2x8x32xf32>,
    return
  }
  func.func @transform_0(%arg0: i32) -> (i32, i32, i32) {
    %c0_i32 = arith.constant 0 : i32
    %c0_i32_0 = arith.constant 0 : i32
    %c0_i32_1 = arith.constant 0 : i32
    return %arg0, %c0_i32, %c0_i32_0 : i32, i32, i32
  }
  func.func @transform_1(%arg0: i32) -> (i32, i32) {
    %c0_i32 = arith.constant 0 : i32
    %c0_i32_0 = arith.constant 0 : i32
    %c0_i32_1 = arith.constant 0 : i32
    return %c0_i32, %c0_i32_0 : i32, i32
  }
  func.func @transform_2(%arg0: i32) -> (i32, i32) {
    %c0_i32 = arith.constant 0 : i32
    %c0_i32_0 = arith.constant 0 : i32
    %c0_i32_1 = arith.constant 0 : i32
    return %c0_i32, %c0_i32_0 : i32, i32
  }
  func.func @transform_3(%arg0: i32) -> (i32, i32) {
    %c0_i32 = arith.constant 0 : i32
    %c0_i32_0 = arith.constant 0 : i32
    %c0_i32_1 = arith.constant 0 : i32
    return %c0_i32, %c0_i32_0 : i32, i32
  }
  func.func @transform_4(%arg0: i32) -> (i32, i32) {
    %c0_i32 = arith.constant 0 : i32
    %c0_i32_0 = arith.constant 0 : i32
    %c0_i32_1 = arith.constant 0 : i32
    return %c0_i32, %c0_i32_0 : i32, i32
  }
  func.func @transform_5(%arg0: i32) -> (i32, i32) {
    %c0_i32 = arith.constant 0 : i32
    %c0_i32_0 = arith.constant 0 : i32
    %c0_i32_1 = arith.constant 0 : i32
    return %c0_i32, %c0_i32_0 : i32, i32
  }
  func.func @transform_6(%arg0: i32) -> (i32, i32) {
    %c0_i32 = arith.constant 0 : i32
    %c0_i32_0 = arith.constant 0 : i32
    %c0_i32_1 = arith.constant 0 : i32
    return %c0_i32, %c0_i32_0 : i32, i32
  }
  func.func @transform_7(%arg0: i32) -> (i32, i32, i32) {
    %c0_i32 = arith.constant 0 : i32
    %c0_i32_0 = arith.constant 0 : i32
    %c0_i32_1 = arith.constant 0 : i32
    return %arg0, %c0_i32, %c0_i32_0 : i32, i32, i32
  }
}

</mosaic_0001>

<llo_original>
// kernel: tpu_custom_call.1
$region0: #{tpu_custom_call.1}
  #allocation0 [shape = 'u32[]', space=smem, size = 0x4, offset = 0x4, fixed_abs, tag = 'smem constant byte address 0x4 - core index']
  #allocation1 [shape = 'u32[144,128]{1,0:T(1,128)}', space=vmem, size = 0x12000, scoped, tag = 'internal scratch']
  %s0 = inlined_call_operand.vmem [shape: f32[2,8,32], index: 0, kind: input, shape index: {}]
  %s1 = inlined_call_operand.vmem [shape: bf16[32,96], index: 1, kind: input, shape index: {}]
  %s2 = inlined_call_operand.vmem [shape: bf16[32,32], index: 2, kind: input, shape index: {}]
  %s3 = inlined_call_operand.vmem [shape: bf16[32,128], index: 3, kind: input, shape index: {}]
  %s4 = inlined_call_operand.vmem [shape: f32[1,128], index: 4, kind: input, shape index: {}]
  %s5 = inlined_call_operand.vmem [shape: bf16[128,32], index: 5, kind: input, shape index: {}]
  %s6 = inlined_call_operand.vmem [shape: f32[1,32], index: 6, kind: input, shape index: {}]
  %s7 = inlined_call_operand.hbm [shape: f32[2,8,32], index: 7, kind: output, shape index: {}]
  %s8 = sld [smem:[#allocation0]]
  $region38: #{tpu_custom_call.1} parent=0
    _
  %s10 = ssub.s32 1, %s8
  %s11 = scalar_select 0, %s10, %s8
  $region1: #{tpu_custom_call.1} parent=0
    #allocation2 [shape = 'u8[8192]{0}', space=vmem, size = 0x2000, scoped, tag = 'output window, operand 0, single buffered']
    #allocation3 [shape = 's32[1]{0}', space=sflag, size = 0x4, scoped, tag = 'scoped memory for tpu_custom_call.1']
    %12 = vsyncpa [#allocation3], 0
    // Predicated region
    $region2: #{tpu_custom_call.1} parent=1 // pred_check
      _
    $region3: #{tpu_custom_call.1} parent=1 // pred_check_branch
      %14 = sbr.rel (0) target = $region5
    $region4: #{tpu_custom_call.1} parent=1 // pred_region
      _
    $region5: #{tpu_custom_call.1} parent=1 // pred_fallthru
      _
    // Predicated region
    $region6: #{tpu_custom_call.1} parent=1 // pred_check
      _
    $region7: #{tpu_custom_call.1} parent=1 // pred_check_branch
      %16 = sbr.rel (0) target = $region9
    $region8: #{tpu_custom_call.1} parent=1 // pred_region
      _
    $region9: #{tpu_custom_call.1} parent=1 // pred_fallthru
      _
    // Predicated region
    $region10: #{tpu_custom_call.1} parent=1 // pred_check
      _
    $region11: #{tpu_custom_call.1} parent=1 // pred_check_branch
      %18 = sbr.rel (0) target = $region13
    $region12: #{tpu_custom_call.1} parent=1 // pred_region
      _
    $region13: #{tpu_custom_call.1} parent=1 // pred_fallthru
      _
    // Predicated region
    $region14: #{tpu_custom_call.1} parent=1 // pred_check
      _
    $region15: #{tpu_custom_call.1} parent=1 // pred_check_branch
      %20 = sbr.rel (0) target = $region17
    $region16: #{tpu_custom_call.1} parent=1 // pred_region
      _
    $region17: #{tpu_custom_call.1} parent=1 // pred_fallthru
      _
    // Predicated region
    $region18: #{tpu_custom_call.1} parent=1 // pred_check
      _
    $region19: #{tpu_custom_call.1} parent=1 // pred_check_branch
      %22 = sbr.rel (0) target = $region21
    $region20: #{tpu_custom_call.1} parent=1 // pred_region
      _
    $region21: #{tpu_custom_call.1} parent=1 // pred_fallthru
      _
    // Predicated region
    $region22: #{tpu_custom_call.1} parent=1 // pred_check
      _
    $region23: #{tpu_custom_call.1} parent=1 // pred_check_branch
      %24 = sbr.rel (0) target = $region25
    $region24: #{tpu_custom_call.1} parent=1 // pred_region
      _
    $region25: #{tpu_custom_call.1} parent=1 // pred_fallthru
      _
    // Predicated region
    $region26: #{tpu_custom_call.1} parent=1 // pred_check
      _
    $region27: #{tpu_custom_call.1} parent=1 // pred_check_branch
      %26 = sbr.rel (0) target = $region29
    $region28: #{tpu_custom_call.1} parent=1 // pred_region
      _
    $region29: #{tpu_custom_call.1} parent=1 // pred_fallthru
      _
    %v28 = vld [vmem:[%s0] sm:$0xff]
    %v29 = vld [vmem:[%s0 + $0x8] sm:$0xff]
    %vm30 = vcmask 261120
    %v31 = vsel %vm30, %v28, 0.0
    %32 = vadd.xlane.f32.xlu0 %v31
    %v33 = vpop.xlane.xlu0 %32
    %v34 = vsel %vm30, %v29, 0.0
    %35 = vadd.xlane.f32.xlu0 %v34
    %v36 = vpop.xlane.xlu0 %35
    %v37 = vrcp.pop 32.0
    %v38 = vmul.f32 %v33, %v37
    %v39 = vmul.f32 %v36, %v37
    %v40 = vsub.f32 %v28, %v38
    %v41 = vsub.f32 %v29, %v39
    %v42 = vmul.f32 %v40, %v40
    %v43 = vmul.f32 %v41, %v41
    %v44 = vsel %vm30, %v42, 0.0
    %45 = vadd.xlane.f32.xlu0 %v44
    %v46 = vpop.xlane.xlu0 %45
    %v47 = vsel %vm30, %v43, 0.0
    %48 = vadd.xlane.f32.xlu0 %v47
    %v49 = vpop.xlane.xlu0 %48
    %v50 = vmul.f32 %v46, %v37
    %v51 = vmul.f32 %v49, %v37
    %v52 = vadd.f32 %v50, 1e-05
    %v53 = vadd.f32 %v51, 1e-05
    %v54 = vrsqrt.pop %v52
    %v55 = vrsqrt.pop %v53
    %v56 = vmul.f32 %v40, %v54
    %v57 = vmul.f32 %v41, %v55
    %v58 = vpack.c.bf16 %v57, %v56
    %v59 = vld [vmem:[%s1] sm:$0xf]
    %v60 = vld [vmem:[%s1 + $0x4] sm:$0xf]
    %v61 = vld [vmem:[%s1 + $0x8] sm:$0xf]
    %v62 = vld [vmem:[%s1 + $0xc] sm:$0xf]
    %v67 = vunpack.c.l.b16 %v59
    %v68 = vunpack.c.l.b16 %v60
    %v69 = vunpack.c.l.b16 %v61
    %v70 = vunpack.c.l.b16 %v62
    %v71 = vpack.c.b16 %v68, %v67
    %v72 = vpack.c.b16 %v70, %v69
    %v76 = vsel %vm30, %v58, 0
    %78 = vmatprep.subr.bf16.mxu0 0
    %79 = vmatpush1.bf16.msra.mxu0 0
    %80 = vmatprep.subr.bf16.mxu0 0
    %81 = vmatpush1.bf16.msra.mxu0 0
    %82 = vmatprep.subr.bf16.mxu0 0
    %83 = vmatpush1.bf16.msra.mxu0 0
    %84 = vmatprep.subr.bf16.mxu0 0
    %85 = vmatpush1.bf16.msra.mxu0 0
    %86 = vmatprep.subr.bf16.mxu0 0
    %87 = vmatpush1.bf16.msra.mxu0 0
    %88 = vmatprep.subr.bf16.mxu0 0
    %89 = vmatpush1.bf16.msra.mxu0 0
    %90 = vmatprep.subr.bf16.mxu0 0
    %91 = vmatpush1.bf16.msra.mxu0 %v72
    %92 = vmatprep.subr.bf16.mxu0 0
    %93 = vmatpush1.bf16.msra.mxu0 %v71
    %94 = vmatprep.subr.bf16.mxu0 0
    %95 = vmatpush2.bf16.msra.mxu0 0
    %96 = vmatprep.subr.bf16.mxu0 0
    %97 = vmatpush2.bf16.msra.mxu0 0
    %98 = vmatprep.subr.bf16.mxu0 0
    %99 = vmatpush2.bf16.msra.mxu0 0
    %100 = vmatprep.subr.bf16.mxu0 0
    %101 = vmatpush2.bf16.msra.mxu0 0
    %102 = vmatprep.subr.bf16.mxu0 0
    %103 = vmatpush2.bf16.msra.mxu0 0
    %104 = vmatprep.subr.bf16.mxu0 0
    %105 = vmatpush2.bf16.msra.mxu0 0
    %106 = vmatprep.subr.bf16.mxu0 0
    %107 = vmatpush2.bf16.msra.mxu0 0
    %108 = vmatprep.subr.bf16.mxu0 0
    %109 = vmatpush2.bf16.msra.mxu0 0
    %110 = vmatprep.mubr.bf16.mxu0 0
    %111 = vmatmul.mubr.bf16.gmra.mxu0 %v76
    %v112 = vpop.f32.mrf.mxu0
    %v113 = vadd.f32 0.0, %v112
    %v114 = vpop.f32.mrf.mxu0
    %v115 = vpop.f32.mrf.mxu0
    %v116 = vadd.f32 0.0, %v115
    %v117 = vpop.f32.mrf.mxu0
    %118 = vdwg.mxu0
    %v119 = vlaneseq
    %v120 = vshrl.u32 %v119, 7
    %v121 = vlaneseq
    %v122 = vand.u32 %v121, 127
    %vm123 = vcmp.ge.s32.totalorder %v120, %v122
    %v124 = vpack.c.bf16 %v113, %v113
    %v125 = vpack.c.bf16 %v116, %v116
    %127 = vrot.lane.b32.xlu0 %v124, 96
    %v128 = vpop.permute.xlu0 %127
    %vm129 = vcmask 64512
    %v131 = vsel %vm129, %v124, 0
    %v134 = vsel %vm129, %v128, 0
    %136 = vmatprep.subr.bf16.mxu0 0
    %137 = vmatpush1.bf16.xpose.msra.mxu0 0
    %138 = vmatprep.subr.bf16.mxu0 0
    %139 = vmatpush1.bf16.xpose.msra.mxu0 0
    %140 = vmatprep.subr.bf16.mxu0 0
    %141 = vmatpush1.bf16.xpose.msra.mxu0 0
    %142 = vmatprep.subr.bf16.mxu0 0
    %143 = vmatpush1.bf16.xpose.msra.mxu0 0
    %144 = vmatprep.subr.bf16.mxu0 0
    %145 = vmatpush1.bf16.xpose.msra.mxu0 0
    %146 = vmatprep.subr.bf16.mxu0 0
    %147 = vmatpush1.bf16.xpose.msra.mxu0 0
    %148 = vmatprep.subr.bf16.mxu0 0
    %149 = vmatpush1.bf16.xpose.msra.mxu0 0
    %150 = vmatprep.subr.bf16.mxu0 0
    %151 = vmatpush1.bf16.xpose.msra.mxu0 %v134
    %152 = vmatprep.subr.bf16.mxu0 0
    %153 = vmatpush2.bf16.xpose.msra.mxu0 0
    %154 = vmatprep.subr.bf16.mxu0 0
    %155 = vmatpush2.bf16.xpose.msra.mxu0 0
    %156 = vmatprep.subr.bf16.mxu0 0
    %157 = vmatpush2.bf16.xpose.msra.mxu0 0
    %158 = vmatprep.subr.bf16.mxu0 0
    %159 = vmatpush2.bf16.xpose.msra.mxu0 0
    %160 = vmatprep.subr.bf16.mxu0 0
    %161 = vmatpush2.bf16.xpose.msra.mxu0 0
    %162 = vmatprep.subr.bf16.mxu0 0
    %163 = vmatpush2.bf16.xpose.msra.mxu0 0
    %164 = vmatprep.subr.bf16.mxu0 0
    %165 = vmatpush2.bf16.xpose.msra.mxu0 0
    %166 = vmatprep.subr.bf16.mxu0 0
    %167 = vmatpush2.bf16.xpose.msra.mxu0 0
    %168 = vmatprep.mubr.bf16.mxu0 0
    %169 = vmatmul.mubr.bf16.gmra.mxu0 %v131
    %v170 = vpop.f32.mrf.mxu0
    %v171 = vadd.f32 0.0, %v170
    %v172 = vpop.f32.mrf.mxu0
    %v173 = vpop.f32.mrf.mxu0
    %v174 = vpop.f32.mrf.mxu0
    %175 = vdwg.mxu0
    %177 = vrot.lane.b32.xlu0 %v125, 96
    %v178 = vpop.permute.xlu0 %177
    %v180 = vsel %vm129, %v125, 0
    %v183 = vsel %vm129, %v178, 0
    %185 = vmatprep.subr.bf16.mxu0 0
    %186 = vmatpush1.bf16.xpose.msra.mxu0 0
    %187 = vmatprep.subr.bf16.mxu0 0
    %188 = vmatpush1.bf16.xpose.msra.mxu0 0
    %189 = vmatprep.subr.bf16.mxu0 0
    %190 = vmatpush1.bf16.xpose.msra.mxu0 0
    %191 = vmatprep.subr.bf16.mxu0 0
    %192 = vmatpush1.bf16.xpose.msra.mxu0 0
    %193 = vmatprep.subr.bf16.mxu0 0
    %194 = vmatpush1.bf16.xpose.msra.mxu0 0
    %195 = vmatprep.subr.bf16.mxu0 0
    %196 = vmatpush1.bf16.xpose.msra.mxu0 0
    %197 = vmatprep.subr.bf16.mxu0 0
    %198 = vmatpush1.bf16.xpose.msra.mxu0 0
    %199 = vmatprep.subr.bf16.mxu0 0
    %200 = vmatpush1.bf16.xpose.msra.mxu0 %v183
    %201 = vmatprep.subr.bf16.mxu0 0
    %202 = vmatpush2.bf16.xpose.msra.mxu0 0
    %203 = vmatprep.subr.bf16.mxu0 0
    %204 = vmatpush2.bf16.xpose.msra.mxu0 0
    %205 = vmatprep.subr.bf16.mxu0 0
    %206 = vmatpush2.bf16.xpose.msra.mxu0 0
    %207 = vmatprep.subr.bf16.mxu0 0
    %208 = vmatpush2.bf16.xpose.msra.mxu0 0
    %209 = vmatprep.subr.bf16.mxu0 0
    %210 = vmatpush2.bf16.xpose.msra.mxu0 0
    %211 = vmatprep.subr.bf16.mxu0 0
    %212 = vmatpush2.bf16.xpose.msra.mxu0 0
    %213 = vmatprep.subr.bf16.mxu0 0
    %214 = vmatpush2.bf16.xpose.msra.mxu0 0
    %215 = vmatprep.subr.bf16.mxu0 0
    %216 = vmatpush2.bf16.xpose.msra.mxu0 0
    %217 = vmatprep.mubr.bf16.mxu0 0
    %218 = vmatmul.mubr.bf16.gmra.mxu0 %v180
    %v219 = vpop.f32.mrf.mxu0
    %v220 = vadd.f32 0.0, %v219
    %v221 = vpop.f32.mrf.mxu0
    %v222 = vpop.f32.mrf.mxu0
    %v223 = vpop.f32.mrf.mxu0
    %224 = vdwg.mxu0
    %v225 = vmul.f32 %v171, 0.17677669
    %v226 = vmul.f32 %v220, 0.17677669
    %v227 = vsel %vm123, 1, 0
    %vm228 = vcmp.eq.s32.totalorder %v227, 1
    %v229 = vsel %vm228, %v225, -inf
    %v230 = vsel %vm228, %v226, -inf
    %v231 = vsel %vm129, %v229, -inf
    %232 = vmax.xlane.f32.xlu0 %v231
    %v233 = vpop.xlane.xlu0 %232
    %v234 = vsel %vm129, %v230, -inf
    %235 = vmax.xlane.f32.xlu0 %v234
    %v236 = vpop.xlane.xlu0 %235
    %v237 = vsub.f32 %v229, %v233
    %v238 = vsub.f32 %v230, %v236
    %v239 = vmul.f32 %v237, 1.442695
    %v240 = vpow.pop %v239
    %v241 = vmul.f32 %v238, 1.442695
    %v242 = vpow.pop %v241
    %v243 = vsel %vm129, %v240, 0.0
    %244 = vadd.xlane.f32.xlu0 %v243
    %v245 = vpop.xlane.xlu0 %244
    %v246 = vsel %vm129, %v242, 0.0
    %247 = vadd.xlane.f32.xlu0 %v246
    %v248 = vpop.xlane.xlu0 %247
    %v249 = vrcp.pop %v245
    %v250 = vrcp.pop %v248
    %v251 = vmul.f32 %v240, %v249
    %v252 = vmul.f32 %v242, %v250
    %v253 = vpack.c.bf16 %v251, %v251
    %v254 = vpack.c.bf16 %v252, %v252
    %255 = vrot.lane.b32.xlu0 %v124, 64
    %v256 = vpop.permute.xlu0 %255
    %v258 = vsel %vm129, %v253, 0
    %vm260 = vcmask 1043456
    %v262 = vsel %vm260, %v256, 0
    %264 = vmatprep.subr.bf16.mxu0 0
    %265 = vmatpush1.bf16.msra.mxu0 0
    %266 = vmatprep.subr.bf16.mxu0 0
    %267 = vmatpush1.bf16.msra.mxu0 0
    %268 = vmatprep.subr.bf16.mxu0 0
    %269 = vmatpush1.bf16.msra.mxu0 0
    %270 = vmatprep.subr.bf16.mxu0 0
    %271 = vmatpush1.bf16.msra.mxu0 0
    %272 = vmatprep.subr.bf16.mxu0 0
    %273 = vmatpush1.bf16.msra.mxu0 0
    %274 = vmatprep.subr.bf16.mxu0 0
    %275 = vmatpush1.bf16.msra.mxu0 0
    %276 = vmatprep.subr.bf16.mxu0 0
    %277 = vmatpush1.bf16.msra.mxu0 0
    %278 = vmatprep.subr.bf16.mxu0 0
    %279 = vmatpush1.bf16.msra.mxu0 %v262
    %280 = vmatprep.subr.bf16.mxu0 0
    %281 = vmatpush2.bf16.msra.mxu0 0
    %282 = vmatprep.subr.bf16.mxu0 0
    %283 = vmatpush2.bf16.msra.mxu0 0
    %284 = vmatprep.subr.bf16.mxu0 0
    %285 = vmatpush2.bf16.msra.mxu0 0
    %286 = vmatprep.subr.bf16.mxu0 0
    %287 = vmatpush2.bf16.msra.mxu0 0
    %288 = vmatprep.subr.bf16.mxu0 0
    %289 = vmatpush2.bf16.msra.mxu0 0
    %290 = vmatprep.subr.bf16.mxu0 0
    %291 = vmatpush2.bf16.msra.mxu0 0
    %292 = vmatprep.subr.bf16.mxu0 0
    %293 = vmatpush2.bf16.msra.mxu0 0
    %294 = vmatprep.subr.bf16.mxu0 0
    %295 = vmatpush2.bf16.msra.mxu0 0
    %296 = vmatprep.mubr.bf16.mxu0 0
    %297 = vmatmul.mubr.bf16.gmra.mxu0 %v258
    %v298 = vpop.f32.mrf.mxu0
    %v299 = vadd.f32 0.0, %v298
    %v300 = vpop.f32.mrf.mxu0
    %v301 = vpop.f32.mrf.mxu0
    %v302 = vpop.f32.mrf.mxu0
    %303 = vdwg.mxu0
    %304 = vrot.lane.b32.xlu0 %v125, 64
    %v305 = vpop.permute.xlu0 %304
    %v307 = vsel %vm129, %v254, 0
    %v310 = vsel %vm260, %v305, 0
    %312 = vmatprep.subr.bf16.mxu0 0
    %313 = vmatpush1.bf16.msra.mxu0 0
    %314 = vmatprep.subr.bf16.mxu0 0
    %315 = vmatpush1.bf16.msra.mxu0 0
    %316 = vmatprep.subr.bf16.mxu0 0
    %317 = vmatpush1.bf16.msra.mxu0 0
    %318 = vmatprep.subr.bf16.mxu0 0
    %319 = vmatpush1.bf16.msra.mxu0 0
    %320 = vmatprep.subr.bf16.mxu0 0
    %321 = vmatpush1.bf16.msra.mxu0 0
    %322 = vmatprep.subr.bf16.mxu0 0
    %323 = vmatpush1.bf16.msra.mxu0 0
    %324 = vmatprep.subr.bf16.mxu0 0
    %325 = vmatpush1.bf16.msra.mxu0 0
    %326 = vmatprep.subr.bf16.mxu0 0
    %327 = vmatpush1.bf16.msra.mxu0 %v310
    %328 = vmatprep.subr.bf16.mxu0 0
    %329 = vmatpush2.bf16.msra.mxu0 0
    %330 = vmatprep.subr.bf16.mxu0 0
    %331 = vmatpush2.bf16.msra.mxu0 0
    %332 = vmatprep.subr.bf16.mxu0 0
    %333 = vmatpush2.bf16.msra.mxu0 0
    %334 = vmatprep.subr.bf16.mxu0 0
    %335 = vmatpush2.bf16.msra.mxu0 0
    %336 = vmatprep.subr.bf16.mxu0 0
    %337 = vmatpush2.bf16.msra.mxu0 0
    %338 = vmatprep.subr.bf16.mxu0 0
    %339 = vmatpush2.bf16.msra.mxu0 0
    %340 = vmatprep.subr.bf16.mxu0 0
    %341 = vmatpush2.bf16.msra.mxu0 0
    %342 = vmatprep.subr.bf16.mxu0 0
    %343 = vmatpush2.bf16.msra.mxu0 0
    %344 = vmatprep.mubr.bf16.mxu0 0
    %345 = vmatmul.mubr.bf16.gmra.mxu0 %v307
    %v346 = vpop.f32.mrf.mxu0
    %v347 = vadd.f32 0.0, %v346
    %v348 = vpop.f32.mrf.mxu0
    %v349 = vpop.f32.mrf.mxu0
    %v350 = vpop.f32.mrf.mxu0
    %351 = vdwg.mxu0
    %352 = vrot.lane.b32.xlu0 %v124, 120
    %v353 = vpop.permute.xlu0 %352
    %354 = vrot.lane.b32.xlu0 %v124, 88
    %v355 = vpop.permute.xlu0 %354
    %v357 = vsel %vm129, %v353, 0
    %v360 = vsel %vm129, %v355, 0
    %362 = vmatprep.subr.bf16.mxu0 0
    %363 = vmatpush1.bf16.xpose.msra.mxu0 0
    %364 = vmatprep.subr.bf16.mxu0 0
    %365 = vmatpush1.bf16.xpose.msra.mxu0 0
    %366 = vmatprep.subr.bf16.mxu0 0
    %367 = vmatpush1.bf16.xpose.msra.mxu0 0
    %368 = vmatprep.subr.bf16.mxu0 0
    %369 = vmatpush1.bf16.xpose.msra.mxu0 0
    %370 = vmatprep.subr.bf16.mxu0 0
    %371 = vmatpush1.bf16.xpose.msra.mxu0 0
    %372 = vmatprep.subr.bf16.mxu0 0
    %373 = vmatpush1.bf16.xpose.msra.mxu0 0
    %374 = vmatprep.subr.bf16.mxu0 0
    %375 = vmatpush1.bf16.xpose.msra.mxu0 0
    %376 = vmatprep.subr.bf16.mxu0 0
    %377 = vmatpush1.bf16.xpose.msra.mxu0 %v360
    %378 = vmatprep.subr.bf16.mxu0 0
    %379 = vmatpush2.bf16.xpose.msra.mxu0 0
    %380 = vmatprep.subr.bf16.mxu0 0
    %381 = vmatpush2.bf16.xpose.msra.mxu0 0
    %382 = vmatprep.subr.bf16.mxu0 0
    %383 = vmatpush2.bf16.xpose.msra.mxu0 0
    %384 = vmatprep.subr.bf16.mxu0 0
    %385 = vmatpush2.bf16.xpose.msra.mxu0 0
    %386 = vmatprep.subr.bf16.mxu0 0
    %387 = vmatpush2.bf16.xpose.msra.mxu0 0
    %388 = vmatprep.subr.bf16.mxu0 0
    %389 = vmatpush2.bf16.xpose.msra.mxu0 0
    %390 = vmatprep.subr.bf16.mxu0 0
    %391 = vmatpush2.bf16.xpose.msra.mxu0 0
    %392 = vmatprep.subr.bf16.mxu0 0
    %393 = vmatpush2.bf16.xpose.msra.mxu0 0
    %394 = vmatprep.mubr.bf16.mxu0 0
    %395 = vmatmul.mubr.bf16.gmra.mxu0 %v357
    %v396 = vpop.f32.mrf.mxu0
    %v397 = vadd.f32 0.0, %v396
    %v398 = vpop.f32.mrf.mxu0
    %v399 = vpop.f32.mrf.mxu0
    %v400 = vpop.f32.mrf.mxu0
    %401 = vdwg.mxu0
    %402 = vrot.lane.b32.xlu0 %v125, 120
    %v403 = vpop.permute.xlu0 %402
    %404 = vrot.lane.b32.xlu0 %v125, 88
    %v405 = vpop.permute.xlu0 %404
    %v407 = vsel %vm129, %v403, 0
    %v410 = vsel %vm129, %v405, 0
    %412 = vmatprep.subr.bf16.mxu0 0
    %413 = vmatpush1.bf16.xpose.msra.mxu0 0
    %414 = vmatprep.subr.bf16.mxu0 0
    %415 = vmatpush1.bf16.xpose.msra.mxu0 0
    %416 = vmatprep.subr.bf16.mxu0 0
    %417 = vmatpush1.bf16.xpose.msra.mxu0 0
    %418 = vmatprep.subr.bf16.mxu0 0
    %419 = vmatpush1.bf16.xpose.msra.mxu0 0
    %420 = vmatprep.subr.bf16.mxu0 0
    %421 = vmatpush1.bf16.xpose.msra.mxu0 0
    %422 = vmatprep.subr.bf16.mxu0 0
    %423 = vmatpush1.bf16.xpose.msra.mxu0 0
    %424 = vmatprep.subr.bf16.mxu0 0
    %425 = vmatpush1.bf16.xpose.msra.mxu0 0
    %426 = vmatprep.subr.bf16.mxu0 0
    %427 = vmatpush1.bf16.xpose.msra.mxu0 %v410
    %428 = vmatprep.subr.bf16.mxu0 0
    %429 = vmatpush2.bf16.xpose.msra.mxu0 0
    %430 = vmatprep.subr.bf16.mxu0 0
    %431 = vmatpush2.bf16.xpose.msra.mxu0 0
    %432 = vmatprep.subr.bf16.mxu0 0
    %433 = vmatpush2.bf16.xpose.msra.mxu0 0
    %434 = vmatprep.subr.bf16.mxu0 0
    %435 = vmatpush2.bf16.xpose.msra.mxu0 0
    %436 = vmatprep.subr.bf16.mxu0 0
    %437 = vmatpush2.bf16.xpose.msra.mxu0 0
    %438 = vmatprep.subr.bf16.mxu0 0
    %439 = vmatpush2.bf16.xpose.msra.mxu0 0
    %440 = vmatprep.subr.bf16.mxu0 0
    %441 = vmatpush2.bf16.xpose.msra.mxu0 0
    %442 = vmatprep.subr.bf16.mxu0 0
    %443 = vmatpush2.bf16.xpose.msra.mxu0 0
    %444 = vmatprep.mubr.bf16.mxu0 0
    %445 = vmatmul.mubr.bf16.gmra.mxu0 %v407
    %v446 = vpop.f32.mrf.mxu0
    %v447 = vadd.f32 0.0, %v446
    %v448 = vpop.f32.mrf.mxu0
    %v449 = vpop.f32.mrf.mxu0
    %v450 = vpop.f32.mrf.mxu0
    %451 = vdwg.mxu0
    %v452 = vmul.f32 %v397, 0.17677669
    %v453 = vmul.f32 %v447, 0.17677669
    %v454 = vsel %vm228, %v452, -inf
    %v455 = vsel %vm228, %v453, -inf
    %v456 = vsel %vm129, %v454, -inf
    %457 = vmax.xlane.f32.xlu0 %v456
    %v458 = vpop.xlane.xlu0 %457
    %v459 = vsel %vm129, %v455, -inf
    %460 = vmax.xlane.f32.xlu0 %v459
    %v461 = vpop.xlane.xlu0 %460
    %v462 = vsub.f32 %v454, %v458
    %v463 = vsub.f32 %v455, %v461
    %v464 = vmul.f32 %v462, 1.442695
    %v465 = vpow.pop %v464
    %v466 = vmul.f32 %v463, 1.442695
    %v467 = vpow.pop %v466
    %v468 = vsel %vm129, %v465, 0.0
    %469 = vadd.xlane.f32.xlu0 %v468
    %v470 = vpop.xlane.xlu0 %469
    %v471 = vsel %vm129, %v467, 0.0
    %472 = vadd.xlane.f32.xlu0 %v471
    %v473 = vpop.xlane.xlu0 %472
    %v474 = vrcp.pop %v470
    %v475 = vrcp.pop %v473
    %v476 = vmul.f32 %v465, %v474
    %v477 = vmul.f32 %v467, %v475
    %v478 = vpack.c.bf16 %v476, %v476
    %v479 = vpack.c.bf16 %v477, %v477
    %480 = vrot.lane.b32.xlu0 %v124, 56
    %v481 = vpop.permute.xlu0 %480
    %v483 = vsel %vm129, %v478, 0
    %v486 = vsel %vm260, %v481, 0
    %488 = vmatprep.subr.bf16.mxu0 0
    %489 = vmatpush1.bf16.msra.mxu0 0
    %490 = vmatprep.subr.bf16.mxu0 0
    %491 = vmatpush1.bf16.msra.mxu0 0
    %492 = vmatprep.subr.bf16.mxu0 0
    %493 = vmatpush1.bf16.msra.mxu0 0
    %494 = vmatprep.subr.bf16.mxu0 0
    %495 = vmatpush1.bf16.msra.mxu0 0
    %496 = vmatprep.subr.bf16.mxu0 0
    %497 = vmatpush1.bf16.msra.mxu0 0
    %498 = vmatprep.subr.bf16.mxu0 0
    %499 = vmatpush1.bf16.msra.mxu0 0
    %500 = vmatprep.subr.bf16.mxu0 0
    %501 = vmatpush1.bf16.msra.mxu0 0
    %502 = vmatprep.subr.bf16.mxu0 0
    %503 = vmatpush1.bf16.msra.mxu0 %v486
    %504 = vmatprep.subr.bf16.mxu0 0
    %505 = vmatpush2.bf16.msra.mxu0 0
    %506 = vmatprep.subr.bf16.mxu0 0
    %507 = vmatpush2.bf16.msra.mxu0 0
    %508 = vmatprep.subr.bf16.mxu0 0
    %509 = vmatpush2.bf16.msra.mxu0 0
    %510 = vmatprep.subr.bf16.mxu0 0
    %511 = vmatpush2.bf16.msra.mxu0 0
    %512 = vmatprep.subr.bf16.mxu0 0
    %513 = vmatpush2.bf16.msra.mxu0 0
    %514 = vmatprep.subr.bf16.mxu0 0
    %515 = vmatpush2.bf16.msra.mxu0 0
    %516 = vmatprep.subr.bf16.mxu0 0
    %517 = vmatpush2.bf16.msra.mxu0 0
    %518 = vmatprep.subr.bf16.mxu0 0
    %519 = vmatpush2.bf16.msra.mxu0 0
    %520 = vmatprep.mubr.bf16.mxu0 0
    %521 = vmatmul.mubr.bf16.gmra.mxu0 %v483
    %v522 = vpop.f32.mrf.mxu0
    %v523 = vadd.f32 0.0, %v522
    %v524 = vpop.f32.mrf.mxu0
    %v525 = vpop.f32.mrf.mxu0
    %v526 = vpop.f32.mrf.mxu0
    %527 = vdwg.mxu0
    %528 = vrot.lane.b32.xlu0 %v125, 56
    %v529 = vpop.permute.xlu0 %528
    %v531 = vsel %vm129, %v479, 0
    %v534 = vsel %vm260, %v529, 0
    %536 = vmatprep.subr.bf16.mxu0 0
    %537 = vmatpush1.bf16.msra.mxu0 0
    %538 = vmatprep.subr.bf16.mxu0 0
    %539 = vmatpush1.bf16.msra.mxu0 0
    %540 = vmatprep.subr.bf16.mxu0 0
    %541 = vmatpush1.bf16.msra.mxu0 0
    %542 = vmatprep.subr.bf16.mxu0 0
    %543 = vmatpush1.bf16.msra.mxu0 0
    %544 = vmatprep.subr.bf16.mxu0 0
    %545 = vmatpush1.bf16.msra.mxu0 0
    %546 = vmatprep.subr.bf16.mxu0 0
    %547 = vmatpush1.bf16.msra.mxu0 0
    %548 = vmatprep.subr.bf16.mxu0 0
    %549 = vmatpush1.bf16.msra.mxu0 0
    %550 = vmatprep.subr.bf16.mxu0 0
    %551 = vmatpush1.bf16.msra.mxu0 %v534
    %552 = vmatprep.subr.bf16.mxu0 0
    %553 = vmatpush2.bf16.msra.mxu0 0
    %554 = vmatprep.subr.bf16.mxu0 0
    %555 = vmatpush2.bf16.msra.mxu0 0
    %556 = vmatprep.subr.bf16.mxu0 0
    %557 = vmatpush2.bf16.msra.mxu0 0
    %558 = vmatprep.subr.bf16.mxu0 0
    %559 = vmatpush2.bf16.msra.mxu0 0
    %560 = vmatprep.subr.bf16.mxu0 0
    %561 = vmatpush2.bf16.msra.mxu0 0
    %562 = vmatprep.subr.bf16.mxu0 0
    %563 = vmatpush2.bf16.msra.mxu0 0
    %564 = vmatprep.subr.bf16.mxu0 0
    %565 = vmatpush2.bf16.msra.mxu0 0
    %566 = vmatprep.subr.bf16.mxu0 0
    %567 = vmatpush2.bf16.msra.mxu0 0
    %568 = vmatprep.mubr.bf16.mxu0 0
    %569 = vmatmul.mubr.bf16.gmra.mxu0 %v531
    %v570 = vpop.f32.mrf.mxu0
    %v571 = vadd.f32 0.0, %v570
    %v572 = vpop.f32.mrf.mxu0
    %v573 = vpop.f32.mrf.mxu0
    %v574 = vpop.f32.mrf.mxu0
    %575 = vdwg.mxu0
    %576 = vrot.lane.b32.xlu0 %v124, 112
    %v577 = vpop.permute.xlu0 %576
    %578 = vrot.lane.b32.xlu0 %v124, 80
    %v579 = vpop.permute.xlu0 %578
    %v581 = vsel %vm129, %v577, 0
    %v584 = vsel %vm129, %v579, 0
    %586 = vmatprep.subr.bf16.mxu0 0
    %587 = vmatpush1.bf16.xpose.msra.mxu0 0
    %588 = vmatprep.subr.bf16.mxu0 0
    %589 = vmatpush1.bf16.xpose.msra.mxu0 0
    %590 = vmatprep.subr.bf16.mxu0 0
    %591 = vmatpush1.bf16.xpose.msra.mxu0 0
    %592 = vmatprep.subr.bf16.mxu0 0
    %593 = vmatpush1.bf16.xpose.msra.mxu0 0
    %594 = vmatprep.subr.bf16.mxu0 0
    %595 = vmatpush1.bf16.xpose.msra.mxu0 0
    %596 = vmatprep.subr.bf16.mxu0 0
    %597 = vmatpush1.bf16.xpose.msra.mxu0 0
    %598 = vmatprep.subr.bf16.mxu0 0
    %599 = vmatpush1.bf16.xpose.msra.mxu0 0
    %600 = vmatprep.subr.bf16.mxu0 0
    %601 = vmatpush1.bf16.xpose.msra.mxu0 %v584
    %602 = vmatprep.subr.bf16.mxu0 0
    %603 = vmatpush2.bf16.xpose.msra.mxu0 0
    %604 = vmatprep.subr.bf16.mxu0 0
    %605 = vmatpush2.bf16.xpose.msra.mxu0 0
    %606 = vmatprep.subr.bf16.mxu0 0
    %607 = vmatpush2.bf16.xpose.msra.mxu0 0
    %608 = vmatprep.subr.bf16.mxu0 0
    %609 = vmatpush2.bf16.xpose.msra.mxu0 0
    %610 = vmatprep.subr.bf16.mxu0 0
    %611 = vmatpush2.bf16.xpose.msra.mxu0 0
    %612 = vmatprep.subr.bf16.mxu0 0
    %613 = vmatpush2.bf16.xpose.msra.mxu0 0
    %614 = vmatprep.subr.bf16.mxu0 0
    %615 = vmatpush2.bf16.xpose.msra.mxu0 0
    %616 = vmatprep.subr.bf16.mxu0 0
    %617 = vmatpush2.bf16.xpose.msra.mxu0 0
    %618 = vmatprep.mubr.bf16.mxu0 0
    %619 = vmatmul.mubr.bf16.gmra.mxu0 %v581
    %v620 = vpop.f32.mrf.mxu0
    %v621 = vadd.f32 0.0, %v620
    %v622 = vpop.f32.mrf.mxu0
    %v623 = vpop.f32.mrf.mxu0
    %v624 = vpop.f32.mrf.mxu0
    %625 = vdwg.mxu0
    %626 = vrot.lane.b32.xlu0 %v125, 112
    %v627 = vpop.permute.xlu0 %626
    %628 = vrot.lane.b32.xlu0 %v125, 80
    %v629 = vpop.permute.xlu0 %628
    %v631 = vsel %vm129, %v627, 0
    %v634 = vsel %vm129, %v629, 0
    %636 = vmatprep.subr.bf16.mxu0 0
    %637 = vmatpush1.bf16.xpose.msra.mxu0 0
    %638 = vmatprep.subr.bf16.mxu0 0
    %639 = vmatpush1.bf16.xpose.msra.mxu0 0
    %640 = vmatprep.subr.bf16.mxu0 0
    %641 = vmatpush1.bf16.xpose.msra.mxu0 0
    %642 = vmatprep.subr.bf16.mxu0 0
    %643 = vmatpush1.bf16.xpose.msra.mxu0 0
    %644 = vmatprep.subr.bf16.mxu0 0
    %645 = vmatpush1.bf16.xpose.msra.mxu0 0
    %646 = vmatprep.subr.bf16.mxu0 0
    %647 = vmatpush1.bf16.xpose.msra.mxu0 0
    %648 = vmatprep.subr.bf16.mxu0 0
    %649 = vmatpush1.bf16.xpose.msra.mxu0 0
    %650 = vmatprep.subr.bf16.mxu0 0
    %651 = vmatpush1.bf16.xpose.msra.mxu0 %v634
    %652 = vmatprep.subr.bf16.mxu0 0
    %653 = vmatpush2.bf16.xpose.msra.mxu0 0
    %654 = vmatprep.subr.bf16.mxu0 0
    %655 = vmatpush2.bf16.xpose.msra.mxu0 0
    %656 = vmatprep.subr.bf16.mxu0 0
    %657 = vmatpush2.bf16.xpose.msra.mxu0 0
    %658 = vmatprep.subr.bf16.mxu0 0
    %659 = vmatpush2.bf16.xpose.msra.mxu0 0
    %660 = vmatprep.subr.bf16.mxu0 0
    %661 = vmatpush2.bf16.xpose.msra.mxu0 0
    %662 = vmatprep.subr.bf16.mxu0 0
    %663 = vmatpush2.bf16.xpose.msra.mxu0 0
    %664 = vmatprep.subr.bf16.mxu0 0
    %665 = vmatpush2.bf16.xpose.msra.mxu0 0
    %666 = vmatprep.subr.bf16.mxu0 0
    %667 = vmatpush2.bf16.xpose.msra.mxu0 0
    %668 = vmatprep.mubr.bf16.mxu0 0
    %669 = vmatmul.mubr.bf16.gmra.mxu0 %v631
    %v670 = vpop.f32.mrf.mxu0
    %v671 = vadd.f32 0.0, %v670
    %v672 = vpop.f32.mrf.mxu0
    %v673 = vpop.f32.mrf.mxu0
    %v674 = vpop.f32.mrf.mxu0
    %675 = vdwg.mxu0
    %v676 = vmul.f32 %v621, 0.17677669
    %v677 = vmul.f32 %v671, 0.17677669
    %v678 = vsel %vm228, %v676, -inf
    %v679 = vsel %vm228, %v677, -inf
    %v680 = vsel %vm129, %v678, -inf
    %681 = vmax.xlane.f32.xlu0 %v680
    %v682 = vpop.xlane.xlu0 %681
    %v683 = vsel %vm129, %v679, -inf
    %684 = vmax.xlane.f32.xlu0 %v683
    %v685 = vpop.xlane.xlu0 %684
    %v686 = vsub.f32 %v678, %v682
    %v687 = vsub.f32 %v679, %v685
    %v688 = vmul.f32 %v686, 1.442695
    %v689 = vpow.pop %v688
    %v690 = vmul.f32 %v687, 1.442695
    %v691 = vpow.pop %v690
    %v692 = vsel %vm129, %v689, 0.0
    %693 = vadd.xlane.f32.xlu0 %v692
    %v694 = vpop.xlane.xlu0 %693
    %v695 = vsel %vm129, %v691, 0.0
    %696 = vadd.xlane.f32.xlu0 %v695
    %v697 = vpop.xlane.xlu0 %696
    %v698 = vrcp.pop %v694
    %v699 = vrcp.pop %v697
    %v700 = vmul.f32 %v689, %v698
    %v701 = vmul.f32 %v691, %v699
    %v702 = vpack.c.bf16 %v700, %v700
    %v703 = vpack.c.bf16 %v701, %v701
    %704 = vrot.lane.b32.xlu0 %v124, 48
    %v705 = vpop.permute.xlu0 %704
    %v707 = vsel %vm129, %v702, 0
    %v710 = vsel %vm260, %v705, 0
    %712 = vmatprep.subr.bf16.mxu0 0
    %713 = vmatpush1.bf16.msra.mxu0 0
    %714 = vmatprep.subr.bf16.mxu0 0
    %715 = vmatpush1.bf16.msra.mxu0 0
    %716 = vmatprep.subr.bf16.mxu0 0
    %717 = vmatpush1.bf16.msra.mxu0 0
    %718 = vmatprep.subr.bf16.mxu0 0
    %719 = vmatpush1.bf16.msra.mxu0 0
    %720 = vmatprep.subr.bf16.mxu0 0
    %721 = vmatpush1.bf16.msra.mxu0 0
    %722 = vmatprep.subr.bf16.mxu0 0
    %723 = vmatpush1.bf16.msra.mxu0 0
    %724 = vmatprep.subr.bf16.mxu0 0
    %725 = vmatpush1.bf16.msra.mxu0 0
    %726 = vmatprep.subr.bf16.mxu0 0
    %727 = vmatpush1.bf16.msra.mxu0 %v710
    %728 = vmatprep.subr.bf16.mxu0 0
    %729 = vmatpush2.bf16.msra.mxu0 0
    %730 = vmatprep.subr.bf16.mxu0 0
    %731 = vmatpush2.bf16.msra.mxu0 0
    %732 = vmatprep.subr.bf16.mxu0 0
    %733 = vmatpush2.bf16.msra.mxu0 0
    %734 = vmatprep.subr.bf16.mxu0 0
    %735 = vmatpush2.bf16.msra.mxu0 0
    %736 = vmatprep.subr.bf16.mxu0 0
    %737 = vmatpush2.bf16.msra.mxu0 0
    %738 = vmatprep.subr.bf16.mxu0 0
    %739 = vmatpush2.bf16.msra.mxu0 0
    %740 = vmatprep.subr.bf16.mxu0 0
    %741 = vmatpush2.bf16.msra.mxu0 0
    %742 = vmatprep.subr.bf16.mxu0 0
    %743 = vmatpush2.bf16.msra.mxu0 0
    %744 = vmatprep.mubr.bf16.mxu0 0
    %745 = vmatmul.mubr.bf16.gmra.mxu0 %v707
    %v746 = vpop.f32.mrf.mxu0
    %v747 = vadd.f32 0.0, %v746
    %v748 = vpop.f32.mrf.mxu0
    %v749 = vpop.f32.mrf.mxu0
    %v750 = vpop.f32.mrf.mxu0
    %751 = vdwg.mxu0
    %752 = vrot.lane.b32.xlu0 %v125, 48
    %v753 = vpop.permute.xlu0 %752
    %v755 = vsel %vm129, %v703, 0
    %v758 = vsel %vm260, %v753, 0
    %760 = vmatprep.subr.bf16.mxu0 0
    %761 = vmatpush1.bf16.msra.mxu0 0
    %762 = vmatprep.subr.bf16.mxu0 0
    %763 = vmatpush1.bf16.msra.mxu0 0
    %764 = vmatprep.subr.bf16.mxu0 0
    %765 = vmatpush1.bf16.msra.mxu0 0
    %766 = vmatprep.subr.bf16.mxu0 0
    %767 = vmatpush1.bf16.msra.mxu0 0
    %768 = vmatprep.subr.bf16.mxu0 0
    %769 = vmatpush1.bf16.msra.mxu0 0
    %770 = vmatprep.subr.bf16.mxu0 0
    %771 = vmatpush1.bf16.msra.mxu0 0
    %772 = vmatprep.subr.bf16.mxu0 0
    %773 = vmatpush1.bf16.msra.mxu0 0
    %774 = vmatprep.subr.bf16.mxu0 0
    %775 = vmatpush1.bf16.msra.mxu0 %v758
    %776 = vmatprep.subr.bf16.mxu0 0
    %777 = vmatpush2.bf16.msra.mxu0 0
    %778 = vmatprep.subr.bf16.mxu0 0
    %779 = vmatpush2.bf16.msra.mxu0 0
    %780 = vmatprep.subr.bf16.mxu0 0
    %781 = vmatpush2.bf16.msra.mxu0 0
    %782 = vmatprep.subr.bf16.mxu0 0
    %783 = vmatpush2.bf16.msra.mxu0 0
    %784 = vmatprep.subr.bf16.mxu0 0
    %785 = vmatpush2.bf16.msra.mxu0 0
    %786 = vmatprep.subr.bf16.mxu0 0
    %787 = vmatpush2.bf16.msra.mxu0 0
    %788 = vmatprep.subr.bf16.mxu0 0
    %789 = vmatpush2.bf16.msra.mxu0 0
    %790 = vmatprep.subr.bf16.mxu0 0
    %791 = vmatpush2.bf16.msra.mxu0 0
    %792 = vmatprep.mubr.bf16.mxu0 0
    %793 = vmatmul.mubr.bf16.gmra.mxu0 %v755
    %v794 = vpop.f32.mrf.mxu0
    %v795 = vadd.f32 0.0, %v794
    %v796 = vpop.f32.mrf.mxu0
    %v797 = vpop.f32.mrf.mxu0
    %v798 = vpop.f32.mrf.mxu0
    %799 = vdwg.mxu0
    %800 = vrot.lane.b32.xlu0 %v124, 104
    %v801 = vpop.permute.xlu0 %800
    %802 = vrot.lane.b32.xlu0 %v124, 72
    %v803 = vpop.permute.xlu0 %802
    %v805 = vsel %vm129, %v801, 0
    %v808 = vsel %vm129, %v803, 0
    %810 = vmatprep.subr.bf16.mxu0 0
    %811 = vmatpush1.bf16.xpose.msra.mxu0 0
    %812 = vmatprep.subr.bf16.mxu0 0
    %813 = vmatpush1.bf16.xpose.msra.mxu0 0
    %814 = vmatprep.subr.bf16.mxu0 0
    %815 = vmatpush1.bf16.xpose.msra.mxu0 0
    %816 = vmatprep.subr.bf16.mxu0 0
    %817 = vmatpush1.bf16.xpose.msra.mxu0 0
    %818 = vmatprep.subr.bf16.mxu0 0
    %819 = vmatpush1.bf16.xpose.msra.mxu0 0
    %820 = vmatprep.subr.bf16.mxu0 0
    %821 = vmatpush1.bf16.xpose.msra.mxu0 0
    %822 = vmatprep.subr.bf16.mxu0 0
    %823 = vmatpush1.bf16.xpose.msra.mxu0 0
    %824 = vmatprep.subr.bf16.mxu0 0
    %825 = vmatpush1.bf16.xpose.msra.mxu0 %v808
    %826 = vmatprep.subr.bf16.mxu0 0
    %827 = vmatpush2.bf16.xpose.msra.mxu0 0
    %828 = vmatprep.subr.bf16.mxu0 0
    %829 = vmatpush2.bf16.xpose.msra.mxu0 0
    %830 = vmatprep.subr.bf16.mxu0 0
    %831 = vmatpush2.bf16.xpose.msra.mxu0 0
    %832 = vmatprep.subr.bf16.mxu0 0
    %833 = vmatpush2.bf16.xpose.msra.mxu0 0
    %834 = vmatprep.subr.bf16.mxu0 0
    %835 = vmatpush2.bf16.xpose.msra.mxu0 0
    %836 = vmatprep.subr.bf16.mxu0 0
    %837 = vmatpush2.bf16.xpose.msra.mxu0 0
    %838 = vmatprep.subr.bf16.mxu0 0
    %839 = vmatpush2.bf16.xpose.msra.mxu0 0
    %840 = vmatprep.subr.bf16.mxu0 0
    %841 = vmatpush2.bf16.xpose.msra.mxu0 0
    %842 = vmatprep.mubr.bf16.mxu0 0
    %843 = vmatmul.mubr.bf16.gmra.mxu0 %v805
    %v844 = vpop.f32.mrf.mxu0
    %v845 = vadd.f32 0.0, %v844
    %v846 = vpop.f32.mrf.mxu0
    %v847 = vpop.f32.mrf.mxu0
    %v848 = vpop.f32.mrf.mxu0
    %849 = vdwg.mxu0
    %850 = vrot.lane.b32.xlu0 %v125, 104
    %v851 = vpop.permute.xlu0 %850
    %852 = vrot.lane.b32.xlu0 %v125, 72
    %v853 = vpop.permute.xlu0 %852
    %v855 = vsel %vm129, %v851, 0
    %v858 = vsel %vm129, %v853, 0
    %860 = vmatprep.subr.bf16.mxu0 0
    %861 = vmatpush1.bf16.xpose.msra.mxu0 0
    %862 = vmatprep.subr.bf16.mxu0 0
    %863 = vmatpush1.bf16.xpose.msra.mxu0 0
    %864 = vmatprep.subr.bf16.mxu0 0
    %865 = vmatpush1.bf16.xpose.msra.mxu0 0
    %866 = vmatprep.subr.bf16.mxu0 0
    %867 = vmatpush1.bf16.xpose.msra.mxu0 0
    %868 = vmatprep.subr.bf16.mxu0 0
    %869 = vmatpush1.bf16.xpose.msra.mxu0 0
    %870 = vmatprep.subr.bf16.mxu0 0
    %871 = vmatpush1.bf16.xpose.msra.mxu0 0
    %872 = vmatprep.subr.bf16.mxu0 0
    %873 = vmatpush1.bf16.xpose.msra.mxu0 0
    %874 = vmatprep.subr.bf16.mxu0 0
    %875 = vmatpush1.bf16.xpose.msra.mxu0 %v858
    %876 = vmatprep.subr.bf16.mxu0 0
    %877 = vmatpush2.bf16.xpose.msra.mxu0 0
    %878 = vmatprep.subr.bf16.mxu0 0
    %879 = vmatpush2.bf16.xpose.msra.mxu0 0
    %880 = vmatprep.subr.bf16.mxu0 0
    %881 = vmatpush2.bf16.xpose.msra.mxu0 0
    %882 = vmatprep.subr.bf16.mxu0 0
    %883 = vmatpush2.bf16.xpose.msra.mxu0 0
    %884 = vmatprep.subr.bf16.mxu0 0
    %885 = vmatpush2.bf16.xpose.msra.mxu0 0
    %886 = vmatprep.subr.bf16.mxu0 0
    %887 = vmatpush2.bf16.xpose.msra.mxu0 0
    %888 = vmatprep.subr.bf16.mxu0 0
    %889 = vmatpush2.bf16.xpose.msra.mxu0 0
    %890 = vmatprep.subr.bf16.mxu0 0
    %891 = vmatpush2.bf16.xpose.msra.mxu0 0
    %892 = vmatprep.mubr.bf16.mxu0 0
    %893 = vmatmul.mubr.bf16.gmra.mxu0 %v855
    %v894 = vpop.f32.mrf.mxu0
    %v895 = vadd.f32 0.0, %v894
    %v896 = vpop.f32.mrf.mxu0
    %v897 = vpop.f32.mrf.mxu0
    %v898 = vpop.f32.mrf.mxu0
    %899 = vdwg.mxu0
    %v900 = vmul.f32 %v845, 0.17677669
    %v901 = vmul.f32 %v895, 0.17677669
    %v902 = vsel %vm228, %v900, -inf
    %v903 = vsel %vm228, %v901, -inf
    %v904 = vsel %vm129, %v902, -inf
    %905 = vmax.xlane.f32.xlu0 %v904
    %v906 = vpop.xlane.xlu0 %905
    %v907 = vsel %vm129, %v903, -inf
    %908 = vmax.xlane.f32.xlu0 %v907
    %v909 = vpop.xlane.xlu0 %908
    %v910 = vsub.f32 %v902, %v906
    %v911 = vsub.f32 %v903, %v909
    %v912 = vmul.f32 %v910, 1.442695
    %v913 = vpow.pop %v912
    %v914 = vmul.f32 %v911, 1.442695
    %v915 = vpow.pop %v914
    %v916 = vsel %vm129, %v913, 0.0
    %917 = vadd.xlane.f32.xlu0 %v916
    %v918 = vpop.xlane.xlu0 %917
    %v919 = vsel %vm129, %v915, 0.0
    %920 = vadd.xlane.f32.xlu0 %v919
    %v921 = vpop.xlane.xlu0 %920
    %v922 = vrcp.pop %v918
    %v923 = vrcp.pop %v921
    %v924 = vmul.f32 %v913, %v922
    %v925 = vmul.f32 %v915, %v923
    %v926 = vpack.c.bf16 %v924, %v924
    %v927 = vpack.c.bf16 %v925, %v925
    %928 = vrot.lane.b32.xlu0 %v124, 40
    %v929 = vpop.permute.xlu0 %928
    %v931 = vsel %vm129, %v926, 0
    %v934 = vsel %vm260, %v929, 0
    %936 = vmatprep.subr.bf16.mxu0 0
    %937 = vmatpush1.bf16.msra.mxu0 0
    %938 = vmatprep.subr.bf16.mxu0 0
    %939 = vmatpush1.bf16.msra.mxu0 0
    %940 = vmatprep.subr.bf16.mxu0 0
    %941 = vmatpush1.bf16.msra.mxu0 0
    %942 = vmatprep.subr.bf16.mxu0 0
    %943 = vmatpush1.bf16.msra.mxu0 0
    %944 = vmatprep.subr.bf16.mxu0 0
    %945 = vmatpush1.bf16.msra.mxu0 0
    %946 = vmatprep.subr.bf16.mxu0 0
    %947 = vmatpush1.bf16.msra.mxu0 0
    %948 = vmatprep.subr.bf16.mxu0 0
    %949 = vmatpush1.bf16.msra.mxu0 0
    %950 = vmatprep.subr.bf16.mxu0 0
    %951 = vmatpush1.bf16.msra.mxu0 %v934
    %952 = vmatprep.subr.bf16.mxu0 0
    %953 = vmatpush2.bf16.msra.mxu0 0
    %954 = vmatprep.subr.bf16.mxu0 0
    %955 = vmatpush2.bf16.msra.mxu0 0
    %956 = vmatprep.subr.bf16.mxu0 0
    %957 = vmatpush2.bf16.msra.mxu0 0
    %958 = vmatprep.subr.bf16.mxu0 0
    %959 = vmatpush2.bf16.msra.mxu0 0
    %960 = vmatprep.subr.bf16.mxu0 0
    %961 = vmatpush2.bf16.msra.mxu0 0
    %962 = vmatprep.subr.bf16.mxu0 0
    %963 = vmatpush2.bf16.msra.mxu0 0
    %964 = vmatprep.subr.bf16.mxu0 0
    %965 = vmatpush2.bf16.msra.mxu0 0
    %966 = vmatprep.subr.bf16.mxu0 0
    %967 = vmatpush2.bf16.msra.mxu0 0
    %968 = vmatprep.mubr.bf16.mxu0 0
    %969 = vmatmul.mubr.bf16.gmra.mxu0 %v931
    %v970 = vpop.f32.mrf.mxu0
    %v971 = vadd.f32 0.0, %v970
    %v972 = vpop.f32.mrf.mxu0
    %v973 = vpop.f32.mrf.mxu0
    %v974 = vpop.f32.mrf.mxu0
    %975 = vdwg.mxu0
    %976 = vrot.lane.b32.xlu0 %v125, 40
    %v977 = vpop.permute.xlu0 %976
    %v979 = vsel %vm129, %v927, 0
    %v982 = vsel %vm260, %v977, 0
    %984 = vmatprep.subr.bf16.mxu0 0
    %985 = vmatpush1.bf16.msra.mxu0 0
    %986 = vmatprep.subr.bf16.mxu0 0
    %987 = vmatpush1.bf16.msra.mxu0 0
    %988 = vmatprep.subr.bf16.mxu0 0
    %989 = vmatpush1.bf16.msra.mxu0 0
    %990 = vmatprep.subr.bf16.mxu0 0
    %991 = vmatpush1.bf16.msra.mxu0 0
    %992 = vmatprep.subr.bf16.mxu0 0
    %993 = vmatpush1.bf16.msra.mxu0 0
    %994 = vmatprep.subr.bf16.mxu0 0
    %995 = vmatpush1.bf16.msra.mxu0 0
    %996 = vmatprep.subr.bf16.mxu0 0
    %997 = vmatpush1.bf16.msra.mxu0 0
    %998 = vmatprep.subr.bf16.mxu0 0
    %999 = vmatpush1.bf16.msra.mxu0 %v982
    %1000 = vmatprep.subr.bf16.mxu0 0
    %1001 = vmatpush2.bf16.msra.mxu0 0
    %1002 = vmatprep.subr.bf16.mxu0 0
    %1003 = vmatpush2.bf16.msra.mxu0 0
    %1004 = vmatprep.subr.bf16.mxu0 0
    %1005 = vmatpush2.bf16.msra.mxu0 0
    %1006 = vmatprep.subr.bf16.mxu0 0
    %1007 = vmatpush2.bf16.msra.mxu0 0
    %1008 = vmatprep.subr.bf16.mxu0 0
    %1009 = vmatpush2.bf16.msra.mxu0 0
    %1010 = vmatprep.subr.bf16.mxu0 0
    %1011 = vmatpush2.bf16.msra.mxu0 0
    %1012 = vmatprep.subr.bf16.mxu0 0
    %1013 = vmatpush2.bf16.msra.mxu0 0
    %1014 = vmatprep.subr.bf16.mxu0 0
    %1015 = vmatpush2.bf16.msra.mxu0 0
    %1016 = vmatprep.mubr.bf16.mxu0 0
    %1017 = vmatmul.mubr.bf16.gmra.mxu0 %v979
    %v1018 = vpop.f32.mrf.mxu0
    %v1019 = vadd.f32 0.0, %v1018
    %v1020 = vpop.f32.mrf.mxu0
    %v1021 = vpop.f32.mrf.mxu0
    %v1022 = vpop.f32.mrf.mxu0
    %1023 = vdwg.mxu0
    %1026 = vrot.lane.b32.xlu0 %v523, 8
    %v1027 = vpop.permute.xlu0 %1026
    %1028 = vrot.lane.b32.xlu0 %v571, 8
    %v1029 = vpop.permute.xlu0 %1028
    %1034 = vrot.lane.b32.xlu0 %v747, 16
    %v1035 = vpop.permute.xlu0 %1034
    %1036 = vrot.lane.b32.xlu0 %v795, 16
    %v1037 = vpop.permute.xlu0 %1036
    %1042 = vrot.lane.b32.xlu0 %v971, 24
    %v1043 = vpop.permute.xlu0 %1042
    %1044 = vrot.lane.b32.xlu0 %v1019, 24
    %v1045 = vpop.permute.xlu0 %1044
    %v1048 = vsel %vm129, %v299, %v1027
    %v1049 = vsel %vm129, %v347, %v1029
    %vm1050 = vcmask 130048
    %v1051 = vsel %vm1050, %v1048, %v1035
    %v1052 = vsel %vm1050, %v1049, %v1037
    %vm1053 = vcmask 195584
    %v1054 = vsel %vm1053, %v1051, %v1043
    %v1055 = vsel %vm1053, %v1052, %v1045
    %v1056 = vpack.c.bf16 %v1055, %v1054
    %v1057 = vld [vmem:[%s2] sm:$0xf]
    %v1058 = vld [vmem:[%s2 + $0x4] sm:$0xf]
    %v1059 = vld [vmem:[%s2 + $0x8] sm:$0xf]
    %v1060 = vld [vmem:[%s2 + $0xc] sm:$0xf]
    %v1065 = vunpack.c.l.b16 %v1057
    %v1066 = vunpack.c.l.b16 %v1058
    %v1067 = vunpack.c.l.b16 %v1059
    %v1068 = vunpack.c.l.b16 %v1060
    %v1069 = vpack.c.b16 %v1066, %v1065
    %v1070 = vpack.c.b16 %v1068, %v1067
    %v1074 = vsel %vm30, %v1056, 0
    %1076 = vmatprep.subr.bf16.mxu0 0
    %1077 = vmatpush1.bf16.msra.mxu0 0
    %1078 = vmatprep.subr.bf16.mxu0 0
    %1079 = vmatpush1.bf16.msra.mxu0 0
    %1080 = vmatprep.subr.bf16.mxu0 0
    %1081 = vmatpush1.bf16.msra.mxu0 0
    %1082 = vmatprep.subr.bf16.mxu0 0
    %1083 = vmatpush1.bf16.msra.mxu0 0
    %1084 = vmatprep.subr.bf16.mxu0 0
    %1085 = vmatpush1.bf16.msra.mxu0 0
    %1086 = vmatprep.subr.bf16.mxu0 0
    %1087 = vmatpush1.bf16.msra.mxu0 0
    %1088 = vmatprep.subr.bf16.mxu0 0
    %1089 = vmatpush1.bf16.msra.mxu0 %v1070
    %1090 = vmatprep.subr.bf16.mxu0 0
    %1091 = vmatpush1.bf16.msra.mxu0 %v1069
    %1092 = vmatprep.subr.bf16.mxu0 0
    %1093 = vmatpush2.bf16.msra.mxu0 0
    %1094 = vmatprep.subr.bf16.mxu0 0
    %1095 = vmatpush2.bf16.msra.mxu0 0
    %1096 = vmatprep.subr.bf16.mxu0 0
    %1097 = vmatpush2.bf16.msra.mxu0 0
    %1098 = vmatprep.subr.bf16.mxu0 0
    %1099 = vmatpush2.bf16.msra.mxu0 0
    %1100 = vmatprep.subr.bf16.mxu0 0
    %1101 = vmatpush2.bf16.msra.mxu0 0
    %1102 = vmatprep.subr.bf16.mxu0 0
    %1103 = vmatpush2.bf16.msra.mxu0 0
    %1104 = vmatprep.subr.bf16.mxu0 0
    %1105 = vmatpush2.bf16.msra.mxu0 0
    %1106 = vmatprep.subr.bf16.mxu0 0
    %1107 = vmatpush2.bf16.msra.mxu0 0
    %1108 = vmatprep.mubr.bf16.mxu0 0
    %1109 = vmatmul.mubr.bf16.gmra.mxu0 %v1074
    %v1110 = vpop.f32.mrf.mxu0
    %v1111 = vadd.f32 0.0, %v1110
    %v1112 = vpop.f32.mrf.mxu0
    %v1113 = vpop.f32.mrf.mxu0
    %v1114 = vadd.f32 0.0, %v1113
    %v1115 = vpop.f32.mrf.mxu0
    %1116 = vdwg.mxu0
    %v1117 = vadd.f32 %v28, %v1111
    %v1118 = vadd.f32 %v29, %v1114
    %v1119 = vsel %vm30, %v1117, 0.0
    %1120 = vadd.xlane.f32.xlu0 %v1119
    %v1121 = vpop.xlane.xlu0 %1120
    %v1122 = vsel %vm30, %v1118, 0.0
    %1123 = vadd.xlane.f32.xlu0 %v1122
    %v1124 = vpop.xlane.xlu0 %1123
    %v1125 = vmul.f32 %v1121, %v37
    %v1126 = vmul.f32 %v1124, %v37
    %v1127 = vsub.f32 %v1117, %v1125
    %v1128 = vsub.f32 %v1118, %v1126
    %v1129 = vmul.f32 %v1127, %v1127
    %v1130 = vmul.f32 %v1128, %v1128
    %v1131 = vsel %vm30, %v1129, 0.0
    %1132 = vadd.xlane.f32.xlu0 %v1131
    %v1133 = vpop.xlane.xlu0 %1132
    %v1134 = vsel %vm30, %v1130, 0.0
    %1135 = vadd.xlane.f32.xlu0 %v1134
    %v1136 = vpop.xlane.xlu0 %1135
    %v1137 = vmul.f32 %v1133, %v37
    %v1138 = vmul.f32 %v1136, %v37
    %v1139 = vadd.f32 %v1137, 1e-05
    %v1140 = vadd.f32 %v1138, 1e-05
    %v1141 = vrsqrt.pop %v1139
    %v1142 = vrsqrt.pop %v1140
    %v1143 = vmul.f32 %v1127, %v1141
    %v1144 = vmul.f32 %v1128, %v1142
    %v1145 = vpack.c.bf16 %v1144, %v1143
    %v1146 = vld [vmem:[%s3] sm:$0xf]
    %v1147 = vld [vmem:[%s3 + $0x4] sm:$0xf]
    %v1148 = vld [vmem:[%s3 + $0x8] sm:$0xf]
    %v1149 = vld [vmem:[%s3 + $0xc] sm:$0xf]
    %v1150 = vld [vmem:[%s4] sm:$0x1]
    %v1152 = vlaneseq
    %v1153 = vshrl.u32 %v1152, 7
    %v1154 = vsub.s32 0, %v1153
    %v1155 = vrot.slane %v1150, %v1154
    %v1161 = vunpack.c.l.b16 %v1146
    %v1162 = vunpack.c.l.b16 %v1147
    %v1163 = vunpack.c.l.b16 %v1148
    %v1164 = vunpack.c.l.b16 %v1149
    %v1165 = vpack.c.b16 %v1162, %v1161
    %v1166 = vpack.c.b16 %v1164, %v1163
    %v1170 = vsel %vm30, %v1145, 0
    %1172 = vmatprep.subr.bf16.mxu0 0
    %1173 = vmatpush1.bf16.msra.mxu0 0
    %1174 = vmatprep.subr.bf16.mxu0 0
    %1175 = vmatpush1.bf16.msra.mxu0 0
    %1176 = vmatprep.subr.bf16.mxu0 0
    %1177 = vmatpush1.bf16.msra.mxu0 0
    %1178 = vmatprep.subr.bf16.mxu0 0
    %1179 = vmatpush1.bf16.msra.mxu0 0
    %1180 = vmatprep.subr.bf16.mxu0 0
    %1181 = vmatpush1.bf16.msra.mxu0 0
    %1182 = vmatprep.subr.bf16.mxu0 0
    %1183 = vmatpush1.bf16.msra.mxu0 0
    %1184 = vmatprep.subr.bf16.mxu0 0
    %1185 = vmatpush1.bf16.msra.mxu0 %v1166
    %1186 = vmatprep.subr.bf16.mxu0 0
    %1187 = vmatpush1.bf16.msra.mxu0 %v1165
    %1188 = vmatprep.subr.bf16.mxu0 0
    %1189 = vmatpush2.bf16.msra.mxu0 0
    %1190 = vmatprep.subr.bf16.mxu0 0
    %1191 = vmatpush2.bf16.msra.mxu0 0
    %1192 = vmatprep.subr.bf16.mxu0 0
    %1193 = vmatpush2.bf16.msra.mxu0 0
    %1194 = vmatprep.subr.bf16.mxu0 0
    %1195 = vmatpush2.bf16.msra.mxu0 0
    %1196 = vmatprep.subr.bf16.mxu0 0
    %1197 = vmatpush2.bf16.msra.mxu0 0
    %1198 = vmatprep.subr.bf16.mxu0 0
    %1199 = vmatpush2.bf16.msra.mxu0 0
    %1200 = vmatprep.subr.bf16.mxu0 0
    %1201 = vmatpush2.bf16.msra.mxu0 0
    %1202 = vmatprep.subr.bf16.mxu0 0
    %1203 = vmatpush2.bf16.msra.mxu0 0
    %1204 = vmatprep.mubr.bf16.mxu0 0
    %1205 = vmatmul.mubr.bf16.gmra.mxu0 %v1170
    %v1206 = vpop.f32.mrf.mxu0
    %v1207 = vadd.f32 %v1155, %v1206
    %v1208 = vpop.f32.mrf.mxu0
    %v1209 = vpop.f32.mrf.mxu0
    %v1210 = vadd.f32 %v1155, %v1209
    %v1211 = vpop.f32.mrf.mxu0
    %1212 = vdwg.mxu0
    %v1213 = vmax.f32 %v1207, 0.0
    %v1214 = vmax.f32 %v1210, 0.0
    %v1215 = vpack.c.bf16 %v1214, %v1213
    %v1216 = vld [vmem:[%s5] sm:$0xf]
    %v1217 = vld [vmem:[%s5 + $0x4] sm:$0xf]
    %v1218 = vld [vmem:[%s5 + $0x8] sm:$0xf]
    %v1219 = vld [vmem:[%s5 + $0xc] sm:$0xf]
    %v1220 = vld [vmem:[%s5 + $0x10] sm:$0xf]
    %v1221 = vld [vmem:[%s5 + $0x14] sm:$0xf]
    %v1222 = vld [vmem:[%s5 + $0x18] sm:$0xf]
    %v1223 = vld [vmem:[%s5 + $0x1c] sm:$0xf]
    %v1224 = vld [vmem:[%s5 + $0x20] sm:$0xf]
    %v1225 = vld [vmem:[%s5 + $0x24] sm:$0xf]
    %v1226 = vld [vmem:[%s5 + $0x28] sm:$0xf]
    %v1227 = vld [vmem:[%s5 + $0x2c] sm:$0xf]
    %v1228 = vld [vmem:[%s5 + $0x30] sm:$0xf]
    %v1229 = vld [vmem:[%s5 + $0x34] sm:$0xf]
    %v1230 = vld [vmem:[%s5 + $0x38] sm:$0xf]
    %v1231 = vld [vmem:[%s5 + $0x3c] sm:$0xf]
    %v1232 = vld [vmem:[%s6] sm:$0x1]
    %v1234 = vlaneseq
    %v1235 = vshrl.u32 %v1234, 7
    %v1236 = vsub.s32 0, %v1235
    %v1237 = vrot.slane %v1232, %v1236
    %v1255 = vunpack.c.l.b16 %v1216
    %v1256 = vunpack.c.l.b16 %v1217
    %v1257 = vunpack.c.l.b16 %v1218
    %v1258 = vunpack.c.l.b16 %v1219
    %v1259 = vunpack.c.l.b16 %v1220
    %v1260 = vunpack.c.l.b16 %v1221
    %v1261 = vunpack.c.l.b16 %v1222
    %v1262 = vunpack.c.l.b16 %v1223
    %v1263 = vunpack.c.l.b16 %v1224
    %v1264 = vunpack.c.l.b16 %v1225
    %v1265 = vunpack.c.l.b16 %v1226
    %v1266 = vunpack.c.l.b16 %v1227
    %v1267 = vunpack.c.l.b16 %v1228
    %v1268 = vunpack.c.l.b16 %v1229
    %v1269 = vunpack.c.l.b16 %v1230
    %v1270 = vunpack.c.l.b16 %v1231
    %v1271 = vpack.c.b16 %v1256, %v1255
    %v1272 = vpack.c.b16 %v1258, %v1257
    %v1273 = vpack.c.b16 %v1260, %v1259
    %v1274 = vpack.c.b16 %v1262, %v1261
    %v1275 = vpack.c.b16 %v1264, %v1263
    %v1276 = vpack.c.b16 %v1266, %v1265
    %v1277 = vpack.c.b16 %v1268, %v1267
    %v1278 = vpack.c.b16 %v1270, %v1269
    %1287 = vmatprep.subr.bf16.mxu0 0
    %1288 = vmatpush1.bf16.msra.mxu0 %v1278
    %1289 = vmatprep.subr.bf16.mxu0 0
    %1290 = vmatpush1.bf16.msra.mxu0 %v1277
    %1291 = vmatprep.subr.bf16.mxu0 0
    %1292 = vmatpush1.bf16.msra.mxu0 %v1276
    %1293 = vmatprep.subr.bf16.mxu0 0
    %1294 = vmatpush1.bf16.msra.mxu0 %v1275
    %1295 = vmatprep.subr.bf16.mxu0 0
    %1296 = vmatpush1.bf16.msra.mxu0 %v1274
    %1297 = vmatprep.subr.bf16.mxu0 0
    %1298 = vmatpush1.bf16.msra.mxu0 %v1273
    %1299 = vmatprep.subr.bf16.mxu0 0
    %1300 = vmatpush1.bf16.msra.mxu0 %v1272
    %1301 = vmatprep.subr.bf16.mxu0 0
    %1302 = vmatpush1.bf16.msra.mxu0 %v1271
    %1303 = vmatprep.subr.bf16.mxu0 0
    %1304 = vmatpush2.bf16.msra.mxu0 0
    %1305 = vmatprep.subr.bf16.mxu0 0
    %1306 = vmatpush2.bf16.msra.mxu0 0
    %1307 = vmatprep.subr.bf16.mxu0 0
    %1308 = vmatpush2.bf16.msra.mxu0 0
    %1309 = vmatprep.subr.bf16.mxu0 0
    %1310 = vmatpush2.bf16.msra.mxu0 0
    %1311 = vmatprep.subr.bf16.mxu0 0
    %1312 = vmatpush2.bf16.msra.mxu0 0
    %1313 = vmatprep.subr.bf16.mxu0 0
    %1314 = vmatpush2.bf16.msra.mxu0 0
    %1315 = vmatprep.subr.bf16.mxu0 0
    %1316 = vmatpush2.bf16.msra.mxu0 0
    %1317 = vmatprep.subr.bf16.mxu0 0
    %1318 = vmatpush2.bf16.msra.mxu0 0
    %1319 = vmatprep.mubr.bf16.mxu0 0
    %1320 = vmatmul.mubr.bf16.gmra.mxu0 %v1215
    %v1321 = vpop.f32.mrf.mxu0
    %v1322 = vadd.f32 %v1237, %v1321
    %v1323 = vpop.f32.mrf.mxu0
    %v1324 = vpop.f32.mrf.mxu0
    %v1325 = vadd.f32 %v1237, %v1324
    %v1326 = vpop.f32.mrf.mxu0
    %1327 = vdwg.mxu0
    %v1328 = vadd.f32 %v1117, %v1322
    %v1329 = vadd.f32 %v1118, %v1325
    %1330 = vst.msk [vmem:[#allocation2] sm:$0xff] %vm30, %v1328
    %1331 = vst.msk [vmem:[#allocation2 + $0x8] sm:$0xff] %vm30, %v1329
    // Predicated region
    $region30: #{tpu_custom_call.1} parent=1 // pred_check
      _
    $region31: #{tpu_custom_call.1} parent=1 // pred_check_branch
      %1333 = sbr.rel (0) target = $region33
    $region32: #{tpu_custom_call.1} parent=1 // pred_region
      %s1335 = ssub.s32 256, 256
      %1336 = vsyncadd [#allocation3], %s1335
      %s1337 = sshll.u32 [#allocation2], 4
      %s1338 = int_to_ptr.vmem [resolvable:$true] %s1337
      %1343 = dma.vmem_to_hbm [thread:$0]  %s1338, 256, %s7, [#allocation3], 128, 128, 8
    $region33: #{tpu_custom_call.1} parent=1 // pred_fallthru
      _
    // Predicated region
    $region34: #{tpu_custom_call.1} parent=1 // pred_check
      _
    $region35: #{tpu_custom_call.1} parent=1 // pred_check_branch
      %1345 = sbr.rel (0) target = $region37
    $region36: #{tpu_custom_call.1} parent=1 // pred_region
      %1346 = dma.done [#allocation3], 256
    $region37: #{tpu_custom_call.1} parent=1 // pred_fallthru
      _
    %1347 = vsyncpa [#allocation3], 1

</llo_original>
